<compile_context>
chip_gen: v7x
topology: tpu7x:2x2x1
jax: 0.10.0
libtpu: 0.0.40
codegen_flags: <defaults>
</compile_context>

<pallas_src>
import functools

import jax
import jax.numpy as jnp
from jax import lax
from jax.experimental import pallas as pl
from jax.experimental.pallas import tpu as pltpu


_NEG_INF = -1e30
_VMEM_LIMIT = 48 * 1024 * 1024          # explicit scoped-VMEM budget (v7x-safe)
_FLASH_VMEM_BUDGET = 40 * 1024 * 1024   # target working set for the flash tiles

_GEMM_TM_CANDS = (512, 256, 128, 64, 32, 16, 8)
_GEMM_TN_CANDS = (512, 256, 128)
_GEMM_TK_CANDS = (512, 256, 128)
_SEQ_TILE_CANDS = (512, 256, 128, 64, 32, 16, 8)


def _round_up(x, m):
    return ((x + m - 1) // m) * m


def _pick_tile(size, candidates):
    """Largest candidate that divides `size`; fall back to the full size."""
    for c in candidates:
        if c <= size and size % c == 0:
            return c
    return size


def _tile_dim(size, candidates, pad_align):
    """Return (tile, padded_size).  Pads instead of emitting a huge full block."""
    for c in candidates:
        if c <= size and size % c == 0:
            return c, size
    if size < candidates[-1]:
        return size, size               # small full dim: fine, fully resident
    padded = _round_up(size, pad_align)
    for c in candidates:
        if padded % c == 0:
            return c, padded
    return pad_align, padded


# ----------------------------------------------------------------------------
# Tiled, pipelined GEMM (projections).  Accumulator grid over (M, N, K).
# ----------------------------------------------------------------------------
def _gemm_kernel(x_ref, w_ref, o_ref, acc_ref):
    @pl.when(pl.program_id(2) == 0)
    def _init():
        acc_ref[...] = jnp.zeros_like(acc_ref)

    acc_ref[...] += jnp.dot(x_ref[...], w_ref[...],
                            preferred_element_type=jnp.float32)

    @pl.when(pl.program_id(2) == pl.num_programs(2) - 1)
    def _store():
        o_ref[...] = acc_ref[...].astype(o_ref.dtype)


def _gemm_bias_kernel(x_ref, w_ref, b_ref, o_ref, acc_ref):
    @pl.when(pl.program_id(2) == 0)
    def _init():
        acc_ref[...] = jnp.zeros_like(acc_ref)

    acc_ref[...] += jnp.dot(x_ref[...], w_ref[...],
                            preferred_element_type=jnp.float32)

    @pl.when(pl.program_id(2) == pl.num_programs(2) - 1)
    def _store():
        o_ref[...] = (acc_ref[...] + b_ref[...].astype(jnp.float32)
                      ).astype(o_ref.dtype)


def pallas_gemm(x, w, b=None):
    """Tiled y = x @ w (+ b).  x: [M, K], w: [K, N], b: [N] or None."""
    M, K = x.shape
    K2, N = w.shape
    assert K == K2
    tm, Mp = _tile_dim(M, _GEMM_TM_CANDS, 8)
    tn, Np = _tile_dim(N, _GEMM_TN_CANDS, 128)
    tk, Kp = _tile_dim(K, _GEMM_TK_CANDS, 128)

    if (Mp, Kp) != (M, K):
        x = jnp.pad(x, ((0, Mp - M), (0, Kp - K)))
    if (Kp, Np) != (K, N):
        w = jnp.pad(w, ((0, Kp - K), (0, Np - N)))
    if b is not None and Np != N:
        b = jnp.pad(b, (0, Np - N))

    grid = (Mp // tm, Np // tn, Kp // tk)

    cost = pl.CostEstimate(
        flops=2 * Mp * Np * Kp,
        transcendentals=0,
        bytes_accessed=(Mp * Kp + Kp * Np * grid[0] + Mp * Np) * x.dtype.itemsize)

    compiler_params = pltpu.CompilerParams(
        dimension_semantics=("parallel", "parallel", "arbitrary"),
        vmem_limit_bytes=_VMEM_LIMIT)

    in_specs = [
        pl.BlockSpec((tm, tk), lambda i, j, k: (i, k)),
        pl.BlockSpec((tk, tn), lambda i, j, k: (k, j)),
    ]
    args = (x, w)
    kernel = _gemm_kernel
    if b is not None:
        in_specs.append(pl.BlockSpec((1, tn), lambda i, j, k: (0, j)))
        args = (x, w, b.reshape(1, Np))
        kernel = _gemm_bias_kernel

    out = pl.pallas_call(
        kernel,
        out_shape=jax.ShapeDtypeStruct((Mp, Np), x.dtype),
        grid=grid,
        in_specs=in_specs,
        out_specs=pl.BlockSpec((tm, tn), lambda i, j, k: (i, j)),
        scratch_shapes=[pltpu.VMEM((tm, tn), jnp.float32)],
        compiler_params=compiler_params,
        cost_estimate=cost,
    )(*args)

    if (Mp, Np) != (M, N):
        out = out[:M, :N]
    return out


# ----------------------------------------------------------------------------
# Flash (online-softmax) attention.  Grid = (B, q_tiles, kv_tiles).
# q/k/v are read straight out of the packed [B, Np, 3*inner] QKV projection
# (no XLA-side transpose); output is written lane-dense as [B, Np, H*Dh]
# (the `b n (h d)` layout the output projection consumes).
# ----------------------------------------------------------------------------
def _flash_kernel(q_ref, k_ref, v_ref, o_ref, m_ref, l_ref, acc_ref, *,
                  heads, dim_head, kv_tile, seq_len, need_mask):
    ki = pl.program_id(2)

    @pl.when(ki == 0)
    def _init():
        m_ref[...] = jnp.full_like(m_ref, _NEG_INF)
        l_ref[...] = jnp.zeros_like(l_ref)
        acc_ref[...] = jnp.zeros_like(acc_ref)

    if need_mask:  # only traced when the sequence was padded (tail-only pad)
        key_idx = ki * kv_tile + lax.broadcasted_iota(jnp.int32, (1, kv_tile), 1)
        valid = key_idx < seq_len                       # (1, tk), lane broadcast

    # Static unroll over heads: each head is its own MXU matmul either way,
    # and per-head 2-D slices of the packed (tq, H*Dh) blocks avoid any
    # in-kernel head transpose.
    for h in range(heads):
        sl = slice(h * dim_head, (h + 1) * dim_head)
        qh = q_ref[0, :, sl]                            # (tq, Dh), native dtype
        kh = k_ref[0, :, sl]                            # (tk, Dh)
        vh = v_ref[0, :, sl]                            # (tk, Dh)

        # QK^T contracting Dh vs Dh; fp32 accumulation on the MXU (no upcast).
        s = lax.dot_general(qh, kh, (((1,), (1,)), ((), ())),
                            preferred_element_type=jnp.float32)    # (tq, tk)
        if need_mask:
            s = jnp.where(valid, s, _NEG_INF)

        m_prev = m_ref[h]                               # (tq, 1)
        l_prev = l_ref[h]
        m_new = jnp.maximum(m_prev, jnp.max(s, axis=-1, keepdims=True))
        corr = jnp.exp(m_prev - m_new)
        p = jnp.exp(s - m_new)                          # (tq, tk) fp32
        l_ref[h] = corr * l_prev + jnp.sum(p, axis=-1, keepdims=True)
        # Cast P only at the MXU boundary (bf16 fast path when inputs are bf16).
        pv = lax.dot_general(p.astype(vh.dtype), vh, (((1,), (0,)), ((), ())),
                             preferred_element_type=jnp.float32)   # (tq, Dh)
        acc_ref[h] = corr * acc_ref[h] + pv
        m_ref[h] = m_new

    @pl.when(ki == pl.num_programs(2) - 1)
    def _finalize():
        outs = []
        for h in range(heads):
            inv_l = pl.reciprocal(l_ref[h], approx=True)           # EUP slot
            outs.append((acc_ref[h] * inv_l).astype(o_ref.dtype))  # (tq, Dh)
        # One lane-dense, unmasked H*Dh-wide store (instead of H masked stores).
        o_ref[0] = jnp.concatenate(outs, axis=-1)                  # (tq, inner)


def _choose_seq_tiles(N, inner, itemsize):
    """Pick (Np, tq, tk): pad N to a tileable length, then size tiles to budget."""
    Np = _round_up(N, 256) if N > 256 else _round_up(N, 8)
    tq = _pick_tile(Np, _SEQ_TILE_CANDS)
    tk = _pick_tile(Np, _SEQ_TILE_CANDS)

    def fits(tq_, tk_):
        blocks = (2 * (tq_ + 2 * tk_) * inner + 2 * tq_ * inner) * itemsize
        acc = tq_ * inner * 4
        sp = 4 * tq_ * tk_ * 4            # s/p fp32 working set (headroom)
        return blocks + acc + sp <= _FLASH_VMEM_BUDGET

    while not fits(tq, tk) and max(tq, tk) > 8:
        if tq >= tk:
            tq //= 2
        else:
            tk //= 2
    return Np, tq, tk


def pallas_flash_attention(qkv, heads, dim_head, seq_len, tq, tk):
    """qkv: [B, Np, 3*inner] packed (q|k|v) projection.  Returns [B, Np, inner]."""
    B, Np, width = qkv.shape
    inner = heads * dim_head
    assert width == 3 * inner
    grid = (B, Np // tq, Np // tk)
    need_mask = seq_len != Np

    kernel = functools.partial(_flash_kernel, heads=heads, dim_head=dim_head,
                               kv_tile=tk, seq_len=seq_len, need_mask=need_mask)

    if inner % 128 == 0:
        # Column-group BlockSpecs read q/k/v straight out of the packed tensor.
        q_spec = pl.BlockSpec((1, tq, inner), lambda b, qi, ki: (b, qi, 0))
        k_spec = pl.BlockSpec((1, tk, inner), lambda b, qi, ki: (b, ki, 1))
        v_spec = pl.BlockSpec((1, tk, inner), lambda b, qi, ki: (b, ki, 2))
        args = (qkv, qkv, qkv)
    else:
        # TODO(synk): packed column-group blocks need inner % 128 == 0; fall back
        # to three contiguous slices (still no head transpose, one extra copy).
        q = qkv[..., :inner]
        k = qkv[..., inner:2 * inner]
        v = qkv[..., 2 * inner:]
        q_spec = pl.BlockSpec((1, tq, inner), lambda b, qi, ki: (b, qi, 0))
        k_spec = pl.BlockSpec((1, tk, inner), lambda b, qi, ki: (b, ki, 0))
        v_spec = pl.BlockSpec((1, tk, inner), lambda b, qi, ki: (b, ki, 0))
        args = (q, k, v)

    o_spec = pl.BlockSpec((1, tq, inner), lambda b, qi, ki: (b, qi, 0))

    itemsize = qkv.dtype.itemsize
    q_tiles = Np // tq
    cost = pl.CostEstimate(
        flops=4 * B * heads * Np * Np * dim_head,
        transcendentals=B * heads * Np * Np,
        bytes_accessed=(B * Np * inner                      # q
                        + 2 * B * q_tiles * Np * inner      # k/v re-reads
                        + B * Np * inner) * itemsize)       # out

    return pl.pallas_call(
        kernel,
        out_shape=jax.ShapeDtypeStruct((B, Np, inner), qkv.dtype),
        grid=grid,
        in_specs=[q_spec, k_spec, v_spec],
        out_specs=o_spec,
        scratch_shapes=[
            pltpu.VMEM((heads, tq, 1), jnp.float32),         # running max m
            pltpu.VMEM((heads, tq, 1), jnp.float32),         # running sum l
            pltpu.VMEM((heads, tq, dim_head), jnp.float32),  # output accumulator
        ],
        compiler_params=pltpu.CompilerParams(
            dimension_semantics=("parallel", "parallel", "arbitrary"),
            vmem_limit_bytes=_VMEM_LIMIT),
        cost_estimate=cost,
    )(*args)


# ----------------------------------------------------------------------------
# Attention module (forward pass), mirroring the PyTorch reference.
# ----------------------------------------------------------------------------
def init_attention_params(key, dim, heads, dim_head, dtype=jnp.float32):
    inner = heads * dim_head
    k1, k2, k3 = jax.random.split(key, 3)
    # Fused Q/K/V projection weight in [in, out] layout; columns = [q | k | v]
    # (== concat of to_q.weight.T and to_kv.weight.T).  to_out has a bias.
    w_qkv = jax.random.normal(k1, (dim, 3 * inner), dtype) * 0.02
    w_out = jax.random.normal(k2, (inner, dim), dtype) * 0.02
    b_out = jax.random.normal(k3, (dim,), dtype) * 0.02
    return dict(w_qkv=w_qkv, w_out=w_out, b_out=b_out)


def attention_forward(params, x, heads, dim_head):
    """x: [B, N, dim].  Self-attention (context=None), mask=None, dropout=0."""
    B, N, dim = x.shape
    inner = heads * dim_head
    scale = dim_head ** (-0.5)

    # Fold the softmax scale into the q columns of the fused weight (free on
    # the host; removes the per-kv-step in-kernel scaling of q).
    w_qkv = params["w_qkv"]
    w_qkv = jnp.concatenate([w_qkv[:, :inner] * scale, w_qkv[:, inner:]], axis=1)

    # Fused Q/K/V projection: one tiled GEMM, x read from HBM once.
    qkv = pallas_gemm(x.reshape(B * N, dim), w_qkv)          # [B*N, 3*inner]
    qkv = qkv.reshape(B, N, 3 * inner)                       # free relayout

    Np, tq, tk = _choose_seq_tiles(N, inner, x.dtype.itemsize)
    if Np != N:
        qkv = jnp.pad(qkv, ((0, 0), (0, Np - N), (0, 0)))    # tail-only pad

    out = pallas_flash_attention(qkv, heads, dim_head, seq_len=N, tq=tq, tk=tk)
    out = out[:, :N].reshape(B * N, inner)                   # already b n (h d)

    out = pallas_gemm(out, params["w_out"], params["b_out"])
    # dropout p=0.0 -> identity
    return out.reshape(B, N, dim)


# Pure-JAX reference for sanity checking.
def attention_reference(params, x, heads, dim_head):
    B, N, dim = x.shape
    inner = heads * dim_head
    scale = dim_head ** (-0.5)
    qkv = x @ params["w_qkv"]
    q, k, v = (qkv[..., :inner], qkv[..., inner:2 * inner], qkv[..., 2 * inner:])

    def to_heads(t):
        return t.reshape(B, N, heads, dim_head).transpose(0, 2, 1, 3)

    qh, kh, vh = to_heads(q), to_heads(k), to_heads(v)
    s = jnp.einsum("bhid,bhjd->bhij", qh, kh) * scale
    p = jax.nn.softmax(s, axis=-1)
    o = jnp.einsum("bhij,bhjd->bhid", p, vh)
    o = o.transpose(0, 2, 1, 3).reshape(B, N, inner)
    return o @ params["w_out"] + params["b_out"]


if __name__ == "__main__":
    B, N, dim = 2, 8, 32
    heads, dim_head = 4, 32          # inner = 128 -> relayout-free packed path

    key = jax.random.PRNGKey(0)
    kp, kx = jax.random.split(key)
    params = init_attention_params(kp, dim, heads, dim_head)
    x = jax.random.normal(kx, (B, N, dim), jnp.float32)

    fwd = jax.jit(functools.partial(attention_forward,
                                    heads=heads, dim_head=dim_head))
    out = jax.block_until_ready(fwd(params, x))

    ref = attention_reference(params, x, heads, dim_head)
    assert out.shape == (B, N, dim)
    # Tolerance loosened slightly for pl.reciprocal(approx=True).
    assert jnp.allclose(out, ref, atol=2e-3, rtol=2e-3), float(
        jnp.max(jnp.abs(out - ref)))

    print("KERNEL_OK")
</pallas_src>

<mosaic_0001>
module attributes {stable_mosaic.version = 11 : i64} {
  func.func @_gemm_kernel(%arg0: i32, %arg1: i32, %arg2: i32, %arg3: memref<16x32xf32, #tpu.memory_space<vmem>>, %arg4: memref<32x128xf32, #tpu.memory_space<vmem>>, %arg5: memref<16x128xf32, #tpu.memory_space<vmem>>, %arg6: memref<16x128xf32, #tpu.memory_space<vmem>>) attributes {dimension_semantics = [#tpu.dimension_semantics<parallel>, #tpu.dimension_semantics<parallel>, #tpu.dimension_semantics<arbitrary>], iteration_bounds = array<i64: 1, 3, 1>, scalar_prefetch = 0 : i64, scratch_operands = 1 : i64, tpu.core_type = #tpu.core_type<tc>, window_params = [{transform_indices = @transform_0, window_bounds = array<i64: 16, 32>}, {transform_indices = @transform_1, window_bounds = array<i64: 32, 128>}, {transform_indices = @transform_2, window_bounds = array<i64: 16, 128>}]} {
    %c0_i32 = arith.constant 0 : i32
    %0 = arith.cmpi eq, %arg2, %c0_i32 : i32
    %1 = arith.extui %0 : i1 to i32
    %c0_i32_0 = arith.constant 0 : i32
    %2 = arith.cmpi ne, %1, %c0_i32_0 : i32
    scf.if %2 {
      %cst_10 = arith.constant 0.000000e+00 : f32
      %12 = vector.broadcast %cst_10 : f32 to vector<16x128xf32>
      %c0_11 = arith.constant 0 : index
      %c0_12 = arith.constant 0 : index
      %13 = vector.load %arg6[%c0_11, %c0_12] : memref<16x128xf32, #tpu.memory_space<vmem>>, vector<16x128xf32>
      tpu.vector_store %arg6[%c0_11, %c0_12], %12 {strides = array<i32>} : memref<16x128xf32, #tpu.memory_space<vmem>>, vector<16x128xf32>,
    } else {
    }
    %c0 = arith.constant 0 : index
    %c0_1 = arith.constant 0 : index
    %3 = vector.load %arg6[%c0, %c0_1] : memref<16x128xf32, #tpu.memory_space<vmem>>, vector<16x128xf32>
    %c0_2 = arith.constant 0 : index
    %c0_3 = arith.constant 0 : index
    %4 = vector.load %arg3[%c0_2, %c0_3] : memref<16x32xf32, #tpu.memory_space<vmem>>, vector<16x32xf32>
    %c0_4 = arith.constant 0 : index
    %c0_5 = arith.constant 0 : index
    %5 = vector.load %arg4[%c0_4, %c0_5] : memref<32x128xf32, #tpu.memory_space<vmem>>, vector<32x128xf32>
    %cst = arith.constant dense<0.000000e+00> : vector<16x128xf32>
    %6 = tpu.matmul %4, %5, %cst {dimension_numbers = #tpu.dot_dimension_numbers<[1], [0], [0], [1], [0, 0, 1, 1], [], []>} : vector<16x32xf32>, vector<32x128xf32>, vector<16x128xf32> -> vector<16x128xf32>
    %7 = arith.addf %3, %6 : vector<16x128xf32>
    %c0_6 = arith.constant 0 : index
    %c0_7 = arith.constant 0 : index
    %8 = vector.load %arg6[%c0_6, %c0_7] : memref<16x128xf32, #tpu.memory_space<vmem>>, vector<16x128xf32>
    tpu.vector_store %arg6[%c0_6, %c0_7], %7 {strides = array<i32>} : memref<16x128xf32, #tpu.memory_space<vmem>>, vector<16x128xf32>,
    %c0_i32_8 = arith.constant 0 : i32
    %9 = arith.cmpi eq, %arg2, %c0_i32_8 : i32
    %10 = arith.extui %9 : i1 to i32
    %c0_i32_9 = arith.constant 0 : i32
    %11 = arith.cmpi ne, %10, %c0_i32_9 : i32
    scf.if %11 {
      %c0_10 = arith.constant 0 : index
      %c0_11 = arith.constant 0 : index
      %12 = vector.load %arg6[%c0_10, %c0_11] : memref<16x128xf32, #tpu.memory_space<vmem>>, vector<16x128xf32>
      %c0_12 = arith.constant 0 : index
      %c0_13 = arith.constant 0 : index
      %13 = vector.load %arg5[%c0_12, %c0_13] : memref<16x128xf32, #tpu.memory_space<vmem>>, vector<16x128xf32>
      tpu.vector_store %arg5[%c0_12, %c0_13], %12 {strides = array<i32>} : memref<16x128xf32, #tpu.memory_space<vmem>>, vector<16x128xf32>,
    } else {
    }
    return
  }
  func.func @transform_0(%arg0: i32, %arg1: i32, %arg2: i32) -> (i32, i32) {
    %c0_i32 = arith.constant 0 : i32
    return %arg0, %arg2 : i32, i32
  }
  func.func @transform_1(%arg0: i32, %arg1: i32, %arg2: i32) -> (i32, i32) {
    %c0_i32 = arith.constant 0 : i32
    return %arg2, %arg1 : i32, i32
  }
  func.func @transform_2(%arg0: i32, %arg1: i32, %arg2: i32) -> (i32, i32) {
    %c0_i32 = arith.constant 0 : i32
    return %arg0, %arg1 : i32, i32
  }
}

module attributes {stable_mosaic.version = 11 : i64} {
  func.func @_flash_kernel(%arg0: i32, %arg1: i32, %arg2: i32, %arg3: memref<1x8x128xf32, #tpu.memory_space<vmem>>, %arg4: memref<1x8x128xf32, #tpu.memory_space<vmem>>, %arg5: memref<1x8x128xf32, #tpu.memory_space<vmem>>, %arg6: memref<1x8x128xf32, #tpu.memory_space<vmem>>, %arg7: memref<4x8x1xf32, #tpu.memory_space<vmem>>, %arg8: memref<4x8x1xf32, #tpu.memory_space<vmem>>, %arg9: memref<4x8x32xf32, #tpu.memory_space<vmem>>) attributes {dimension_semantics = [#tpu.dimension_semantics<parallel>, #tpu.dimension_semantics<parallel>, #tpu.dimension_semantics<arbitrary>], iteration_bounds = array<i64: 2, 1, 1>, scalar_prefetch = 0 : i64, scratch_operands = 3 : i64, tpu.core_type = #tpu.core_type<tc>, window_params = [{transform_indices = @transform_0, window_bounds = array<i64: 1, 8, 128>}, {transform_indices = @transform_1, window_bounds = array<i64: 1, 8, 128>}, {transform_indices = @transform_2, window_bounds = array<i64: 1, 8, 128>}, {transform_indices = @transform_3, window_bounds = array<i64: 1, 8, 128>}]} {
    %c0_i32 = arith.constant 0 : i32
    %0 = arith.cmpi eq, %arg2, %c0_i32 : i32
    %1 = arith.extui %0 : i1 to i32
    %c0_i32_0 = arith.constant 0 : i32
    %2 = arith.cmpi ne, %1, %c0_i32_0 : i32
    scf.if %2 {
      %cst_119 = arith.constant -1.000000e+30 : f32
      %158 = vector.broadcast %cst_119 : f32 to vector<4x8x1xf32>
      %c0_120 = arith.constant 0 : index
      %c0_121 = arith.constant 0 : index
      %c0_122 = arith.constant 0 : index
      %159 = vector.load %arg7[%c0_120, %c0_121, %c0_122] : memref<4x8x1xf32, #tpu.memory_space<vmem>>, vector<4x8x1xf32>
      tpu.vector_store %arg7[%c0_120, %c0_121, %c0_122], %158 {strides = array<i32>} : memref<4x8x1xf32, #tpu.memory_space<vmem>>, vector<4x8x1xf32>,
      %cst_123 = arith.constant 0.000000e+00 : f32
      %160 = vector.broadcast %cst_123 : f32 to vector<4x8x1xf32>
      %c0_124 = arith.constant 0 : index
      %c0_125 = arith.constant 0 : index
      %c0_126 = arith.constant 0 : index
      %161 = vector.load %arg8[%c0_124, %c0_125, %c0_126] : memref<4x8x1xf32, #tpu.memory_space<vmem>>, vector<4x8x1xf32>
      tpu.vector_store %arg8[%c0_124, %c0_125, %c0_126], %160 {strides = array<i32>} : memref<4x8x1xf32, #tpu.memory_space<vmem>>, vector<4x8x1xf32>,
      %cst_127 = arith.constant 0.000000e+00 : f32
      %162 = vector.broadcast %cst_127 : f32 to vector<4x8x32xf32>
      %c0_128 = arith.constant 0 : index
      %c0_129 = arith.constant 0 : index
      %c0_130 = arith.constant 0 : index
      %163 = vector.load %arg9[%c0_128, %c0_129, %c0_130] : memref<4x8x32xf32, #tpu.memory_space<vmem>>, vector<4x8x32xf32>
      tpu.vector_store %arg9[%c0_128, %c0_129, %c0_130], %162 {strides = array<i32>} : memref<4x8x32xf32, #tpu.memory_space<vmem>>, vector<4x8x32xf32>,
    } else {
    }
    %c0 = arith.constant 0 : index
    %c0_1 = arith.constant 0 : index
    %c0_2 = arith.constant 0 : index
    %3 = vector.load %arg3[%c0, %c0_1, %c0_2] : memref<1x8x128xf32, #tpu.memory_space<vmem>>, vector<1x8x32xf32>
    %4 = vector.shape_cast %3 : vector<1x8x32xf32> to vector<8x32xf32>
    %c0_3 = arith.constant 0 : index
    %c0_4 = arith.constant 0 : index
    %c0_5 = arith.constant 0 : index
    %5 = vector.load %arg4[%c0_3, %c0_4, %c0_5] : memref<1x8x128xf32, #tpu.memory_space<vmem>>, vector<1x8x32xf32>
    %6 = vector.shape_cast %5 : vector<1x8x32xf32> to vector<8x32xf32>
    %c0_6 = arith.constant 0 : index
    %c0_7 = arith.constant 0 : index
    %c0_8 = arith.constant 0 : index
    %7 = vector.load %arg5[%c0_6, %c0_7, %c0_8] : memref<1x8x128xf32, #tpu.memory_space<vmem>>, vector<1x8x32xf32>
    %8 = vector.shape_cast %7 : vector<1x8x32xf32> to vector<8x32xf32>
    %cst = arith.constant dense<0.000000e+00> : vector<8x8xf32>
    %9 = tpu.matmul %4, %6, %cst {dimension_numbers = #tpu.dot_dimension_numbers<[1], [1], [0], [0], [0, 0, 1, 0], [], []>} : vector<8x32xf32>, vector<8x32xf32>, vector<8x8xf32> -> vector<8x8xf32>
    %c0_9 = arith.constant 0 : index
    %c0_10 = arith.constant 0 : index
    %c0_11 = arith.constant 0 : index
    %10 = vector.load %arg7[%c0_9, %c0_10, %c0_11] : memref<4x8x1xf32, #tpu.memory_space<vmem>>, vector<1x8x1xf32>
    %11 = vector.shape_cast %10 : vector<1x8x1xf32> to vector<8x1xf32>
    %c0_12 = arith.constant 0 : index
    %c0_13 = arith.constant 0 : index
    %c0_14 = arith.constant 0 : index
    %12 = vector.load %arg8[%c0_12, %c0_13, %c0_14] : memref<4x8x1xf32, #tpu.memory_space<vmem>>, vector<1x8x1xf32>
    %13 = vector.shape_cast %12 : vector<1x8x1xf32> to vector<8x1xf32>
    %cst_15 = arith.constant dense<0xFF800000> : vector<8xf32>
    %14 = vector.multi_reduction <maximumf>, %9, %cst_15 [1] : vector<8x8xf32> to vector<8xf32>
    %15 = vector.shape_cast %14 : vector<8xf32> to vector<8x1xf32>
    %16 = arith.maximumf %11, %15 : vector<8x1xf32>
    %17 = arith.subf %11, %16 : vector<8x1xf32>
    %18 = math.exp %17 : vector<8x1xf32>
    %19 = vector.broadcast %16 : vector<8x1xf32> to vector<8x8xf32>
    %20 = arith.subf %9, %19 : vector<8x8xf32>
    %21 = math.exp %20 : vector<8x8xf32>
    %22 = arith.mulf %18, %13 : vector<8x1xf32>
    %cst_16 = arith.constant dense<0.000000e+00> : vector<8xf32>
    %23 = vector.multi_reduction <add>, %21, %cst_16 [1] : vector<8x8xf32> to vector<8xf32>
    %24 = vector.shape_cast %23 : vector<8xf32> to vector<8x1xf32>
    %25 = arith.addf %22, %24 : vector<8x1xf32>
    %c0_17 = arith.constant 0 : index
    %c0_18 = arith.constant 0 : index
    %c0_19 = arith.constant 0 : index
    %26 = vector.load %arg8[%c0_17, %c0_18, %c0_19] : memref<4x8x1xf32, #tpu.memory_space<vmem>>, vector<1x8x1xf32>
    %27 = vector.shape_cast %26 : vector<1x8x1xf32> to vector<8x1xf32>
    %28 = vector.shape_cast %25 : vector<8x1xf32> to vector<1x8x1xf32>
    tpu.vector_store %arg8[%c0_17, %c0_18, %c0_19], %28 {strides = array<i32>} : memref<4x8x1xf32, #tpu.memory_space<vmem>>, vector<1x8x1xf32>,
    %cst_20 = arith.constant dense<0.000000e+00> : vector<8x32xf32>
    %29 = tpu.matmul %21, %8, %cst_20 {dimension_numbers = #tpu.dot_dimension_numbers<[1], [0], [0], [1], [0, 0, 1, 1], [], []>} : vector<8x8xf32>, vector<8x32xf32>, vector<8x32xf32> -> vector<8x32xf32>
    %c0_21 = arith.constant 0 : index
    %c0_22 = arith.constant 0 : index
    %c0_23 = arith.constant 0 : index
    %30 = vector.load %arg9[%c0_21, %c0_22, %c0_23] : memref<4x8x32xf32, #tpu.memory_space<vmem>>, vector<1x8x32xf32>
    %31 = vector.shape_cast %30 : vector<1x8x32xf32> to vector<8x32xf32>
    %32 = vector.broadcast %18 : vector<8x1xf32> to vector<8x32xf32>
    %33 = arith.mulf %32, %31 : vector<8x32xf32>
    %34 = arith.addf %33, %29 : vector<8x32xf32>
    %c0_24 = arith.constant 0 : index
    %c0_25 = arith.constant 0 : index
    %c0_26 = arith.constant 0 : index
    %35 = vector.load %arg9[%c0_24, %c0_25, %c0_26] : memref<4x8x32xf32, #tpu.memory_space<vmem>>, vector<1x8x32xf32>
    %36 = vector.shape_cast %35 : vector<1x8x32xf32> to vector<8x32xf32>
    %37 = vector.shape_cast %34 : vector<8x32xf32> to vector<1x8x32xf32>
    tpu.vector_store %arg9[%c0_24, %c0_25, %c0_26], %37 {strides = array<i32>} : memref<4x8x32xf32, #tpu.memory_space<vmem>>, vector<1x8x32xf32>,
    %c0_27 = arith.constant 0 : index
    %c0_28 = arith.constant 0 : index
    %c0_29 = arith.constant 0 : index
    %38 = vector.load %arg7[%c0_27, %c0_28, %c0_29] : memref<4x8x1xf32, #tpu.memory_space<vmem>>, vector<1x8x1xf32>
    %39 = vector.shape_cast %38 : vector<1x8x1xf32> to vector<8x1xf32>
    %40 = vector.shape_cast %16 : vector<8x1xf32> to vector<1x8x1xf32>
    tpu.vector_store %arg7[%c0_27, %c0_28, %c0_29], %40 {strides = array<i32>} : memref<4x8x1xf32, #tpu.memory_space<vmem>>, vector<1x8x1xf32>,
    %c0_30 = arith.constant 0 : index
    %c0_31 = arith.constant 0 : index
    %c32 = arith.constant 32 : index
    %41 = vector.load %arg3[%c0_30, %c0_31, %c32] : memref<1x8x128xf32, #tpu.memory_space<vmem>>, vector<1x8x32xf32>
    %42 = vector.shape_cast %41 : vector<1x8x32xf32> to vector<8x32xf32>
    %c0_32 = arith.constant 0 : index
    %c0_33 = arith.constant 0 : index
    %c32_34 = arith.constant 32 : index
    %43 = vector.load %arg4[%c0_32, %c0_33, %c32_34] : memref<1x8x128xf32, #tpu.memory_space<vmem>>, vector<1x8x32xf32>
    %44 = vector.shape_cast %43 : vector<1x8x32xf32> to vector<8x32xf32>
    %c0_35 = arith.constant 0 : index
    %c0_36 = arith.constant 0 : index
    %c32_37 = arith.constant 32 : index
    %45 = vector.load %arg5[%c0_35, %c0_36, %c32_37] : memref<1x8x128xf32, #tpu.memory_space<vmem>>, vector<1x8x32xf32>
    %46 = vector.shape_cast %45 : vector<1x8x32xf32> to vector<8x32xf32>
    %cst_38 = arith.constant dense<0.000000e+00> : vector<8x8xf32>
    %47 = tpu.matmul %42, %44, %cst_38 {dimension_numbers = #tpu.dot_dimension_numbers<[1], [1], [0], [0], [0, 0, 1, 0], [], []>} : vector<8x32xf32>, vector<8x32xf32>, vector<8x8xf32> -> vector<8x8xf32>
    %c1 = arith.constant 1 : index
    %c0_39 = arith.constant 0 : index
    %c0_40 = arith.constant 0 : index
    %48 = vector.load %arg7[%c1, %c0_39, %c0_40] : memref<4x8x1xf32, #tpu.memory_space<vmem>>, vector<1x8x1xf32>
    %49 = vector.shape_cast %48 : vector<1x8x1xf32> to vector<8x1xf32>
    %c1_41 = arith.constant 1 : index
    %c0_42 = arith.constant 0 : index
    %c0_43 = arith.constant 0 : index
    %50 = vector.load %arg8[%c1_41, %c0_42, %c0_43] : memref<4x8x1xf32, #tpu.memory_space<vmem>>, vector<1x8x1xf32>
    %51 = vector.shape_cast %50 : vector<1x8x1xf32> to vector<8x1xf32>
    %cst_44 = arith.constant dense<0xFF800000> : vector<8xf32>
    %52 = vector.multi_reduction <maximumf>, %47, %cst_44 [1] : vector<8x8xf32> to vector<8xf32>
    %53 = vector.shape_cast %52 : vector<8xf32> to vector<8x1xf32>
    %54 = arith.maximumf %49, %53 : vector<8x1xf32>
    %55 = arith.subf %49, %54 : vector<8x1xf32>
    %56 = math.exp %55 : vector<8x1xf32>
    %57 = vector.broadcast %54 : vector<8x1xf32> to vector<8x8xf32>
    %58 = arith.subf %47, %57 : vector<8x8xf32>
    %59 = math.exp %58 : vector<8x8xf32>
    %60 = arith.mulf %56, %51 : vector<8x1xf32>
    %cst_45 = arith.constant dense<0.000000e+00> : vector<8xf32>
    %61 = vector.multi_reduction <add>, %59, %cst_45 [1] : vector<8x8xf32> to vector<8xf32>
    %62 = vector.shape_cast %61 : vector<8xf32> to vector<8x1xf32>
    %63 = arith.addf %60, %62 : vector<8x1xf32>
    %c1_46 = arith.constant 1 : index
    %c0_47 = arith.constant 0 : index
    %c0_48 = arith.constant 0 : index
    %64 = vector.load %arg8[%c1_46, %c0_47, %c0_48] : memref<4x8x1xf32, #tpu.memory_space<vmem>>, vector<1x8x1xf32>
    %65 = vector.shape_cast %64 : vector<1x8x1xf32> to vector<8x1xf32>
    %66 = vector.shape_cast %63 : vector<8x1xf32> to vector<1x8x1xf32>
    tpu.vector_store %arg8[%c1_46, %c0_47, %c0_48], %66 {strides = array<i32>} : memref<4x8x1xf32, #tpu.memory_space<vmem>>, vector<1x8x1xf32>,
    %cst_49 = arith.constant dense<0.000000e+00> : vector<8x32xf32>
    %67 = tpu.matmul %59, %46, %cst_49 {dimension_numbers = #tpu.dot_dimension_numbers<[1], [0], [0], [1], [0, 0, 1, 1], [], []>} : vector<8x8xf32>, vector<8x32xf32>, vector<8x32xf32> -> vector<8x32xf32>
    %c1_50 = arith.constant 1 : index
    %c0_51 = arith.constant 0 : index
    %c0_52 = arith.constant 0 : index
    %68 = vector.load %arg9[%c1_50, %c0_51, %c0_52] : memref<4x8x32xf32, #tpu.memory_space<vmem>>, vector<1x8x32xf32>
    %69 = vector.shape_cast %68 : vector<1x8x32xf32> to vector<8x32xf32>
    %70 = vector.broadcast %56 : vector<8x1xf32> to vector<8x32xf32>
    %71 = arith.mulf %70, %69 : vector<8x32xf32>
    %72 = arith.addf %71, %67 : vector<8x32xf32>
    %c1_53 = arith.constant 1 : index
    %c0_54 = arith.constant 0 : index
    %c0_55 = arith.constant 0 : index
    %73 = vector.load %arg9[%c1_53, %c0_54, %c0_55] : memref<4x8x32xf32, #tpu.memory_space<vmem>>, vector<1x8x32xf32>
    %74 = vector.shape_cast %73 : vector<1x8x32xf32> to vector<8x32xf32>
    %75 = vector.shape_cast %72 : vector<8x32xf32> to vector<1x8x32xf32>
    tpu.vector_store %arg9[%c1_53, %c0_54, %c0_55], %75 {strides = array<i32>} : memref<4x8x32xf32, #tpu.memory_space<vmem>>, vector<1x8x32xf32>,
    %c1_56 = arith.constant 1 : index
    %c0_57 = arith.constant 0 : index
    %c0_58 = arith.constant 0 : index
    %76 = vector.load %arg7[%c1_56, %c0_57, %c0_58] : memref<4x8x1xf32, #tpu.memory_space<vmem>>, vector<1x8x1xf32>
    %77 = vector.shape_cast %76 : vector<1x8x1xf32> to vector<8x1xf32>
    %78 = vector.shape_cast %54 : vector<8x1xf32> to vector<1x8x1xf32>
    tpu.vector_store %arg7[%c1_56, %c0_57, %c0_58], %78 {strides = array<i32>} : memref<4x8x1xf32, #tpu.memory_space<vmem>>, vector<1x8x1xf32>,
    %c0_59 = arith.constant 0 : index
    %c0_60 = arith.constant 0 : index
    %c64 = arith.constant 64 : index
    %79 = vector.load %arg3[%c0_59, %c0_60, %c64] : memref<1x8x128xf32, #tpu.memory_space<vmem>>, vector<1x8x32xf32>
    %80 = vector.shape_cast %79 : vector<1x8x32xf32> to vector<8x32xf32>
    %c0_61 = arith.constant 0 : index
    %c0_62 = arith.constant 0 : index
    %c64_63 = arith.constant 64 : index
    %81 = vector.load %arg4[%c0_61, %c0_62, %c64_63] : memref<1x8x128xf32, #tpu.memory_space<vmem>>, vector<1x8x32xf32>
    %82 = vector.shape_cast %81 : vector<1x8x32xf32> to vector<8x32xf32>
    %c0_64 = arith.constant 0 : index
    %c0_65 = arith.constant 0 : index
    %c64_66 = arith.constant 64 : index
    %83 = vector.load %arg5[%c0_64, %c0_65, %c64_66] : memref<1x8x128xf32, #tpu.memory_space<vmem>>, vector<1x8x32xf32>
    %84 = vector.shape_cast %83 : vector<1x8x32xf32> to vector<8x32xf32>
    %cst_67 = arith.constant dense<0.000000e+00> : vector<8x8xf32>
    %85 = tpu.matmul %80, %82, %cst_67 {dimension_numbers = #tpu.dot_dimension_numbers<[1], [1], [0], [0], [0, 0, 1, 0], [], []>} : vector<8x32xf32>, vector<8x32xf32>, vector<8x8xf32> -> vector<8x8xf32>
    %c2 = arith.constant 2 : index
    %c0_68 = arith.constant 0 : index
    %c0_69 = arith.constant 0 : index
    %86 = vector.load %arg7[%c2, %c0_68, %c0_69] : memref<4x8x1xf32, #tpu.memory_space<vmem>>, vector<1x8x1xf32>
    %87 = vector.shape_cast %86 : vector<1x8x1xf32> to vector<8x1xf32>
    %c2_70 = arith.constant 2 : index
    %c0_71 = arith.constant 0 : index
    %c0_72 = arith.constant 0 : index
    %88 = vector.load %arg8[%c2_70, %c0_71, %c0_72] : memref<4x8x1xf32, #tpu.memory_space<vmem>>, vector<1x8x1xf32>
    %89 = vector.shape_cast %88 : vector<1x8x1xf32> to vector<8x1xf32>
    %cst_73 = arith.constant dense<0xFF800000> : vector<8xf32>
    %90 = vector.multi_reduction <maximumf>, %85, %cst_73 [1] : vector<8x8xf32> to vector<8xf32>
    %91 = vector.shape_cast %90 : vector<8xf32> to vector<8x1xf32>
    %92 = arith.maximumf %87, %91 : vector<8x1xf32>
    %93 = arith.subf %87, %92 : vector<8x1xf32>
    %94 = math.exp %93 : vector<8x1xf32>
    %95 = vector.broadcast %92 : vector<8x1xf32> to vector<8x8xf32>
    %96 = arith.subf %85, %95 : vector<8x8xf32>
    %97 = math.exp %96 : vector<8x8xf32>
    %98 = arith.mulf %94, %89 : vector<8x1xf32>
    %cst_74 = arith.constant dense<0.000000e+00> : vector<8xf32>
    %99 = vector.multi_reduction <add>, %97, %cst_74 [1] : vector<8x8xf32> to vector<8xf32>
    %100 = vector.shape_cast %99 : vector<8xf32> to vector<8x1xf32>
    %101 = arith.addf %98, %100 : vector<8x1xf32>
    %c2_75 = arith.constant 2 : index
    %c0_76 = arith.constant 0 : index
    %c0_77 = arith.constant 0 : index
    %102 = vector.load %arg8[%c2_75, %c0_76, %c0_77] : memref<4x8x1xf32, #tpu.memory_space<vmem>>, vector<1x8x1xf32>
    %103 = vector.shape_cast %102 : vector<1x8x1xf32> to vector<8x1xf32>
    %104 = vector.shape_cast %101 : vector<8x1xf32> to vector<1x8x1xf32>
    tpu.vector_store %arg8[%c2_75, %c0_76, %c0_77], %104 {strides = array<i32>} : memref<4x8x1xf32, #tpu.memory_space<vmem>>, vector<1x8x1xf32>,
    %cst_78 = arith.constant dense<0.000000e+00> : vector<8x32xf32>
    %105 = tpu.matmul %97, %84, %cst_78 {dimension_numbers = #tpu.dot_dimension_numbers<[1], [0], [0], [1], [0, 0, 1, 1], [], []>} : vector<8x8xf32>, vector<8x32xf32>, vector<8x32xf32> -> vector<8x32xf32>
    %c2_79 = arith.constant 2 : index
    %c0_80 = arith.constant 0 : index
    %c0_81 = arith.constant 0 : index
    %106 = vector.load %arg9[%c2_79, %c0_80, %c0_81] : memref<4x8x32xf32, #tpu.memory_space<vmem>>, vector<1x8x32xf32>
    %107 = vector.shape_cast %106 : vector<1x8x32xf32> to vector<8x32xf32>
    %108 = vector.broadcast %94 : vector<8x1xf32> to vector<8x32xf32>
    %109 = arith.mulf %108, %107 : vector<8x32xf32>
    %110 = arith.addf %109, %105 : vector<8x32xf32>
    %c2_82 = arith.constant 2 : index
    %c0_83 = arith.constant 0 : index
    %c0_84 = arith.constant 0 : index
    %111 = vector.load %arg9[%c2_82, %c0_83, %c0_84] : memref<4x8x32xf32, #tpu.memory_space<vmem>>, vector<1x8x32xf32>
    %112 = vector.shape_cast %111 : vector<1x8x32xf32> to vector<8x32xf32>
    %113 = vector.shape_cast %110 : vector<8x32xf32> to vector<1x8x32xf32>
    tpu.vector_store %arg9[%c2_82, %c0_83, %c0_84], %113 {strides = array<i32>} : memref<4x8x32xf32, #tpu.memory_space<vmem>>, vector<1x8x32xf32>,
    %c2_85 = arith.constant 2 : index
    %c0_86 = arith.constant 0 : index
    %c0_87 = arith.constant 0 : index
    %114 = vector.load %arg7[%c2_85, %c0_86, %c0_87] : memref<4x8x1xf32, #tpu.memory_space<vmem>>, vector<1x8x1xf32>
    %115 = vector.shape_cast %114 : vector<1x8x1xf32> to vector<8x1xf32>
    %116 = vector.shape_cast %92 : vector<8x1xf32> to vector<1x8x1xf32>
    tpu.vector_store %arg7[%c2_85, %c0_86, %c0_87], %116 {strides = array<i32>} : memref<4x8x1xf32, #tpu.memory_space<vmem>>, vector<1x8x1xf32>,
    %c0_88 = arith.constant 0 : index
    %c0_89 = arith.constant 0 : index
    %c96 = arith.constant 96 : index
    %117 = vector.load %arg3[%c0_88, %c0_89, %c96] : memref<1x8x128xf32, #tpu.memory_space<vmem>>, vector<1x8x32xf32>
    %118 = vector.shape_cast %117 : vector<1x8x32xf32> to vector<8x32xf32>
    %c0_90 = arith.constant 0 : index
    %c0_91 = arith.constant 0 : index
    %c96_92 = arith.constant 96 : index
    %119 = vector.load %arg4[%c0_90, %c0_91, %c96_92] : memref<1x8x128xf32, #tpu.memory_space<vmem>>, vector<1x8x32xf32>
    %120 = vector.shape_cast %119 : vector<1x8x32xf32> to vector<8x32xf32>
    %c0_93 = arith.constant 0 : index
    %c0_94 = arith.constant 0 : index
    %c96_95 = arith.constant 96 : index
    %121 = vector.load %arg5[%c0_93, %c0_94, %c96_95] : memref<1x8x128xf32, #tpu.memory_space<vmem>>, vector<1x8x32xf32>
    %122 = vector.shape_cast %121 : vector<1x8x32xf32> to vector<8x32xf32>
    %cst_96 = arith.constant dense<0.000000e+00> : vector<8x8xf32>
    %123 = tpu.matmul %118, %120, %cst_96 {dimension_numbers = #tpu.dot_dimension_numbers<[1], [1], [0], [0], [0, 0, 1, 0], [], []>} : vector<8x32xf32>, vector<8x32xf32>, vector<8x8xf32> -> vector<8x8xf32>
    %c3 = arith.constant 3 : index
    %c0_97 = arith.constant 0 : index
    %c0_98 = arith.constant 0 : index
    %124 = vector.load %arg7[%c3, %c0_97, %c0_98] : memref<4x8x1xf32, #tpu.memory_space<vmem>>, vector<1x8x1xf32>
    %125 = vector.shape_cast %124 : vector<1x8x1xf32> to vector<8x1xf32>
    %c3_99 = arith.constant 3 : index
    %c0_100 = arith.constant 0 : index
    %c0_101 = arith.constant 0 : index
    %126 = vector.load %arg8[%c3_99, %c0_100, %c0_101] : memref<4x8x1xf32, #tpu.memory_space<vmem>>, vector<1x8x1xf32>
    %127 = vector.shape_cast %126 : vector<1x8x1xf32> to vector<8x1xf32>
    %cst_102 = arith.constant dense<0xFF800000> : vector<8xf32>
    %128 = vector.multi_reduction <maximumf>, %123, %cst_102 [1] : vector<8x8xf32> to vector<8xf32>
    %129 = vector.shape_cast %128 : vector<8xf32> to vector<8x1xf32>
    %130 = arith.maximumf %125, %129 : vector<8x1xf32>
    %131 = arith.subf %125, %130 : vector<8x1xf32>
    %132 = math.exp %131 : vector<8x1xf32>
    %133 = vector.broadcast %130 : vector<8x1xf32> to vector<8x8xf32>
    %134 = arith.subf %123, %133 : vector<8x8xf32>
    %135 = math.exp %134 : vector<8x8xf32>
    %136 = arith.mulf %132, %127 : vector<8x1xf32>
    %cst_103 = arith.constant dense<0.000000e+00> : vector<8xf32>
    %137 = vector.multi_reduction <add>, %135, %cst_103 [1] : vector<8x8xf32> to vector<8xf32>
    %138 = vector.shape_cast %137 : vector<8xf32> to vector<8x1xf32>
    %139 = arith.addf %136, %138 : vector<8x1xf32>
    %c3_104 = arith.constant 3 : index
    %c0_105 = arith.constant 0 : index
    %c0_106 = arith.constant 0 : index
    %140 = vector.load %arg8[%c3_104, %c0_105, %c0_106] : memref<4x8x1xf32, #tpu.memory_space<vmem>>, vector<1x8x1xf32>
    %141 = vector.shape_cast %140 : vector<1x8x1xf32> to vector<8x1xf32>
    %142 = vector.shape_cast %139 : vector<8x1xf32> to vector<1x8x1xf32>
    tpu.vector_store %arg8[%c3_104, %c0_105, %c0_106], %142 {strides = array<i32>} : memref<4x8x1xf32, #tpu.memory_space<vmem>>, vector<1x8x1xf32>,
    %cst_107 = arith.constant dense<0.000000e+00> : vector<8x32xf32>
    %143 = tpu.matmul %135, %122, %cst_107 {dimension_numbers = #tpu.dot_dimension_numbers<[1], [0], [0], [1], [0, 0, 1, 1], [], []>} : vector<8x8xf32>, vector<8x32xf32>, vector<8x32xf32> -> vector<8x32xf32>
    %c3_108 = arith.constant 3 : index
    %c0_109 = arith.constant 0 : index
    %c0_110 = arith.constant 0 : index
    %144 = vector.load %arg9[%c3_108, %c0_109, %c0_110] : memref<4x8x32xf32, #tpu.memory_space<vmem>>, vector<1x8x32xf32>
    %145 = vector.shape_cast %144 : vector<1x8x32xf32> to vector<8x32xf32>
    %146 = vector.broadcast %132 : vector<8x1xf32> to vector<8x32xf32>
    %147 = arith.mulf %146, %145 : vector<8x32xf32>
    %148 = arith.addf %147, %143 : vector<8x32xf32>
    %c3_111 = arith.constant 3 : index
    %c0_112 = arith.constant 0 : index
    %c0_113 = arith.constant 0 : index
    %149 = vector.load %arg9[%c3_111, %c0_112, %c0_113] : memref<4x8x32xf32, #tpu.memory_space<vmem>>, vector<1x8x32xf32>
    %150 = vector.shape_cast %149 : vector<1x8x32xf32> to vector<8x32xf32>
    %151 = vector.shape_cast %148 : vector<8x32xf32> to vector<1x8x32xf32>
    tpu.vector_store %arg9[%c3_111, %c0_112, %c0_113], %151 {strides = array<i32>} : memref<4x8x32xf32, #tpu.memory_space<vmem>>, vector<1x8x32xf32>,
    %c3_114 = arith.constant 3 : index
    %c0_115 = arith.constant 0 : index
    %c0_116 = arith.constant 0 : index
    %152 = vector.load %arg7[%c3_114, %c0_115, %c0_116] : memref<4x8x1xf32, #tpu.memory_space<vmem>>, vector<1x8x1xf32>
    %153 = vector.shape_cast %152 : vector<1x8x1xf32> to vector<8x1xf32>
    %154 = vector.shape_cast %130 : vector<8x1xf32> to vector<1x8x1xf32>
    tpu.vector_store %arg7[%c3_114, %c0_115, %c0_116], %154 {strides = array<i32>} : memref<4x8x1xf32, #tpu.memory_space<vmem>>, vector<1x8x1xf32>,
    %c0_i32_117 = arith.constant 0 : i32
    %155 = arith.cmpi eq, %arg2, %c0_i32_117 : i32
    %156 = arith.extui %155 : i1 to i32
    %c0_i32_118 = arith.constant 0 : i32
    %157 = arith.cmpi ne, %156, %c0_i32_118 : i32
    scf.if %157 {
      %c0_119 = arith.constant 0 : index
      %c0_120 = arith.constant 0 : index
      %c0_121 = arith.constant 0 : index
      %158 = vector.load %arg8[%c0_119, %c0_120, %c0_121] : memref<4x8x1xf32, #tpu.memory_space<vmem>>, vector<1x8x1xf32>
      %159 = vector.shape_cast %158 : vector<1x8x1xf32> to vector<8x1xf32>
      %160 = tpu.reciprocal %159 {approx = true} : vector<8x1xf32> -> vector<8x1xf32>
      %c0_122 = arith.constant 0 : index
      %c0_123 = arith.constant 0 : index
      %c0_124 = arith.constant 0 : index
      %161 = vector.load %arg9[%c0_122, %c0_123, %c0_124] : memref<4x8x32xf32, #tpu.memory_space<vmem>>, vector<1x8x32xf32>
      %162 = vector.shape_cast %161 : vector<1x8x32xf32> to vector<8x32xf32>
      %163 = vector.broadcast %160 : vector<8x1xf32> to vector<8x32xf32>
      %164 = arith.mulf %162, %163 : vector<8x32xf32>
      %c1_125 = arith.constant 1 : index
      %c0_126 = arith.constant 0 : index
      %c0_127 = arith.constant 0 : index
      %165 = vector.load %arg8[%c1_125, %c0_126, %c0_127] : memref<4x8x1xf32, #tpu.memory_space<vmem>>, vector<1x8x1xf32>
      %166 = vector.shape_cast %165 : vector<1x8x1xf32> to vector<8x1xf32>
      %167 = tpu.reciprocal %166 {approx = true} : vector<8x1xf32> -> vector<8x1xf32>
      %c1_128 = arith.constant 1 : index
      %c0_129 = arith.constant 0 : index
      %c0_130 = arith.constant 0 : index
      %168 = vector.load %arg9[%c1_128, %c0_129, %c0_130] : memref<4x8x32xf32, #tpu.memory_space<vmem>>, vector<1x8x32xf32>
      %169 = vector.shape_cast %168 : vector<1x8x32xf32> to vector<8x32xf32>
      %170 = vector.broadcast %167 : vector<8x1xf32> to vector<8x32xf32>
      %171 = arith.mulf %169, %170 : vector<8x32xf32>
      %c2_131 = arith.constant 2 : index
      %c0_132 = arith.constant 0 : index
      %c0_133 = arith.constant 0 : index
      %172 = vector.load %arg8[%c2_131, %c0_132, %c0_133] : memref<4x8x1xf32, #tpu.memory_space<vmem>>, vector<1x8x1xf32>
      %173 = vector.shape_cast %172 : vector<1x8x1xf32> to vector<8x1xf32>
      %174 = tpu.reciprocal %173 {approx = true} : vector<8x1xf32> -> vector<8x1xf32>
      %c2_134 = arith.constant 2 : index
      %c0_135 = arith.constant 0 : index
      %c0_136 = arith.constant 0 : index
      %175 = vector.load %arg9[%c2_134, %c0_135, %c0_136] : memref<4x8x32xf32, #tpu.memory_space<vmem>>, vector<1x8x32xf32>
      %176 = vector.shape_cast %175 : vector<1x8x32xf32> to vector<8x32xf32>
      %177 = vector.broadcast %174 : vector<8x1xf32> to vector<8x32xf32>
      %178 = arith.mulf %176, %177 : vector<8x32xf32>
      %c3_137 = arith.constant 3 : index
      %c0_138 = arith.constant 0 : index
      %c0_139 = arith.constant 0 : index
      %179 = vector.load %arg8[%c3_137, %c0_138, %c0_139] : memref<4x8x1xf32, #tpu.memory_space<vmem>>, vector<1x8x1xf32>
      %180 = vector.shape_cast %179 : vector<1x8x1xf32> to vector<8x1xf32>
      %181 = tpu.reciprocal %180 {approx = true} : vector<8x1xf32> -> vector<8x1xf32>
      %c3_140 = arith.constant 3 : index
      %c0_141 = arith.constant 0 : index
      %c0_142 = arith.constant 0 : index
      %182 = vector.load %arg9[%c3_140, %c0_141, %c0_142] : memref<4x8x32xf32, #tpu.memory_space<vmem>>, vector<1x8x32xf32>
      %183 = vector.shape_cast %182 : vector<1x8x32xf32> to vector<8x32xf32>
      %184 = vector.broadcast %181 : vector<8x1xf32> to vector<8x32xf32>
      %185 = arith.mulf %183, %184 : vector<8x32xf32>
      %186 = tpu.concatenate %164, %171, %178, %185 in 1 : vector<8x32xf32>, vector<8x32xf32>, vector<8x32xf32>, vector<8x32xf32> -> vector<8x128xf32>
      %c0_143 = arith.constant 0 : index
      %c0_144 = arith.constant 0 : index
      %c0_145 = arith.constant 0 : index
      %187 = vector.load %arg6[%c0_143, %c0_144, %c0_145] : memref<1x8x128xf32, #tpu.memory_space<vmem>>, vector<1x8x128xf32>
      %188 = vector.shape_cast %187 : vector<1x8x128xf32> to vector<8x128xf32>
      %189 = vector.shape_cast %186 : vector<8x128xf32> to vector<1x8x128xf32>
      tpu.vector_store %arg6[%c0_143, %c0_144, %c0_145], %189 {strides = array<i32>} : memref<1x8x128xf32, #tpu.memory_space<vmem>>, vector<1x8x128xf32>,
    } else {
    }
    return
  }
  func.func @transform_0(%arg0: i32, %arg1: i32, %arg2: i32) -> (i32, i32, i32) {
    %c0_i32 = arith.constant 0 : i32
    %c0_i32_0 = arith.constant 0 : i32
    return %arg0, %arg1, %c0_i32 : i32, i32, i32
  }
  func.func @transform_1(%arg0: i32, %arg1: i32, %arg2: i32) -> (i32, i32, i32) {
    %c1_i32 = arith.constant 1 : i32
    %c0_i32 = arith.constant 0 : i32
    return %arg0, %arg2, %c1_i32 : i32, i32, i32
  }
  func.func @transform_2(%arg0: i32, %arg1: i32, %arg2: i32) -> (i32, i32, i32) {
    %c2_i32 = arith.constant 2 : i32
    %c0_i32 = arith.constant 0 : i32
    return %arg0, %arg2, %c2_i32 : i32, i32, i32
  }
  func.func @transform_3(%arg0: i32, %arg1: i32, %arg2: i32) -> (i32, i32, i32) {
    %c0_i32 = arith.constant 0 : i32
    %c0_i32_0 = arith.constant 0 : i32
    return %arg0, %arg1, %c0_i32 : i32, i32, i32
  }
}

module attributes {stable_mosaic.version = 11 : i64} {
  func.func @_gemm_bias_kernel(%arg0: i32, %arg1: i32, %arg2: i32, %arg3: memref<16x128xf32, #tpu.memory_space<vmem>>, %arg4: memref<128x32xf32, #tpu.memory_space<vmem>>, %arg5: memref<1x32xf32, #tpu.memory_space<vmem>>, %arg6: memref<16x32xf32, #tpu.memory_space<vmem>>, %arg7: memref<16x32xf32, #tpu.memory_space<vmem>>) attributes {dimension_semantics = [#tpu.dimension_semantics<parallel>, #tpu.dimension_semantics<parallel>, #tpu.dimension_semantics<arbitrary>], iteration_bounds = array<i64: 1, 1, 1>, scalar_prefetch = 0 : i64, scratch_operands = 1 : i64, tpu.core_type = #tpu.core_type<tc>, window_params = [{transform_indices = @transform_0, window_bounds = array<i64: 16, 128>}, {transform_indices = @transform_1, window_bounds = array<i64: 128, 32>}, {transform_indices = @transform_2, window_bounds = array<i64: 1, 32>}, {transform_indices = @transform_3, window_bounds = array<i64: 16, 32>}]} {
    %c0_i32 = arith.constant 0 : i32
    %0 = arith.cmpi eq, %arg2, %c0_i32 : i32
    %1 = arith.extui %0 : i1 to i32
    %c0_i32_0 = arith.constant 0 : i32
    %2 = arith.cmpi ne, %1, %c0_i32_0 : i32
    scf.if %2 {
      %cst_10 = arith.constant 0.000000e+00 : f32
      %12 = vector.broadcast %cst_10 : f32 to vector<16x32xf32>
      %c0_11 = arith.constant 0 : index
      %c0_12 = arith.constant 0 : index
      %13 = vector.load %arg7[%c0_11, %c0_12] : memref<16x32xf32, #tpu.memory_space<vmem>>, vector<16x32xf32>
      tpu.vector_store %arg7[%c0_11, %c0_12], %12 {strides = array<i32>} : memref<16x32xf32, #tpu.memory_space<vmem>>, vector<16x32xf32>,
    } else {
    }
    %c0 = arith.constant 0 : index
    %c0_1 = arith.constant 0 : index
    %3 = vector.load %arg7[%c0, %c0_1] : memref<16x32xf32, #tpu.memory_space<vmem>>, vector<16x32xf32>
    %c0_2 = arith.constant 0 : index
    %c0_3 = arith.constant 0 : index
    %4 = vector.load %arg3[%c0_2, %c0_3] : memref<16x128xf32, #tpu.memory_space<vmem>>, vector<16x128xf32>
    %c0_4 = arith.constant 0 : index
    %c0_5 = arith.constant 0 : index
    %5 = vector.load %arg4[%c0_4, %c0_5] : memref<128x32xf32, #tpu.memory_space<vmem>>, vector<128x32xf32>
    %cst = arith.constant dense<0.000000e+00> : vector<16x32xf32>
    %6 = tpu.matmul %4, %5, %cst {dimension_numbers = #tpu.dot_dimension_numbers<[1], [0], [0], [1], [0, 0, 1, 1], [], []>} : vector<16x128xf32>, vector<128x32xf32>, vector<16x32xf32> -> vector<16x32xf32>
    %7 = arith.addf %3, %6 : vector<16x32xf32>
    %c0_6 = arith.constant 0 : index
    %c0_7 = arith.constant 0 : index
    %8 = vector.load %arg7[%c0_6, %c0_7] : memref<16x32xf32, #tpu.memory_space<vmem>>, vector<16x32xf32>
    tpu.vector_store %arg7[%c0_6, %c0_7], %7 {strides = array<i32>} : memref<16x32xf32, #tpu.memory_space<vmem>>, vector<16x32xf32>,
    %c0_i32_8 = arith.constant 0 : i32
    %9 = arith.cmpi eq, %arg2, %c0_i32_8 : i32
    %10 = arith.extui %9 : i1 to i32
    %c0_i32_9 = arith.constant 0 : i32
    %11 = arith.cmpi ne, %10, %c0_i32_9 : i32
    scf.if %11 {
      %c0_10 = arith.constant 0 : index
      %c0_11 = arith.constant 0 : index
      %12 = vector.load %arg7[%c0_10, %c0_11] : memref<16x32xf32, #tpu.memory_space<vmem>>, vector<16x32xf32>
      %c0_12 = arith.constant 0 : index
      %c0_13 = arith.constant 0 : index
      %13 = vector.load %arg5[%c0_12, %c0_13] : memref<1x32xf32, #tpu.memory_space<vmem>>, vector<1x32xf32>
      %14 = vector.broadcast %13 : vector<1x32xf32> to vector<16x32xf32>
      %15 = arith.addf %12, %14 : vector<16x32xf32>
      %c0_14 = arith.constant 0 : index
      %c0_15 = arith.constant 0 : index
      %16 = vector.load %arg6[%c0_14, %c0_15] : memref<16x32xf32, #tpu.memory_space<vmem>>, vector<16x32xf32>
      tpu.vector_store %arg6[%c0_14, %c0_15], %15 {strides = array<i32>} : memref<16x32xf32, #tpu.memory_space<vmem>>, vector<16x32xf32>,
    } else {
    }
    return
  }
  func.func @transform_0(%arg0: i32, %arg1: i32, %arg2: i32) -> (i32, i32) {
    %c0_i32 = arith.constant 0 : i32
    return %arg0, %arg2 : i32, i32
  }
  func.func @transform_1(%arg0: i32, %arg1: i32, %arg2: i32) -> (i32, i32) {
    %c0_i32 = arith.constant 0 : i32
    return %arg2, %arg1 : i32, i32
  }
  func.func @transform_2(%arg0: i32, %arg1: i32, %arg2: i32) -> (i32, i32) {
    %c0_i32 = arith.constant 0 : i32
    %c0_i32_0 = arith.constant 0 : i32
    return %c0_i32, %arg1 : i32, i32
  }
  func.func @transform_3(%arg0: i32, %arg1: i32, %arg2: i32) -> (i32, i32) {
    %c0_i32 = arith.constant 0 : i32
    return %arg0, %arg1 : i32, i32
  }
}

</mosaic_0001>

<llo_original>
// kernel: attention_forward.3
$region0: #{attention_forward.3}
  #allocation0 [shape = 'u32[]', space=smem, size = 0x4, offset = 0x4, fixed_abs, tag = 'smem constant byte address 0x4 - core index']
  #allocation1 [shape = 'u32[144,128]{1,0:T(1,128)}', space=vmem, size = 0x12000, scoped, tag = 'internal scratch']
  #allocation2 [shape = 'f32[16,128]{1,0:T(8,128)}', space=vmem, size = 0x2000, scoped, tag = 'scratch operand']
  %s0 = inlined_call_operand.vmem [shape: f32[16,32], index: 0, kind: input, shape index: {}]
  %s1 = inlined_call_operand.vmem [shape: f32[32,384], index: 1, kind: input, shape index: {}]
  %s2 = inlined_call_operand.vmem [shape: f32[16,384], index: 2, kind: output, shape index: {}]
  %s3 = sld [smem:[#allocation0]]
  $region121: #{attention_forward.3} parent=0
    _
  %s5 = ssub.s32 1, %s3
  %s6 = scalar_select 0, %s5, %s3
  $region1: #{attention_forward.3} parent=0
    #allocation3 [shape = 'u8[32768]{0}', space=vmem, size = 0x8000, scoped, tag = 'input window, operand 1']
    #allocation4 [shape = 'u8[16384]{0}', space=vmem, size = 0x4000, scoped, tag = 'output window, operand 0']
    loop: start=0, step=1, limit=5
    $region2: #{attention_forward.3} parent=1 // loop_pre_header
      _
    $region3: #{attention_forward.3} parent=1 // loop_header
      %s8 = sphi 0, %s12
      %p9 = scmp.ge.s32.totalorder %s8, 5
      %s15 = sphi 0, %s34
      %s16 = sphi 0, %s30
      %s17 = sphi 0, %s26
      %s18 = sphi 0, %s15
      %s19 = sphi 0, %s16
      %s20 = sphi 0, %s17
      %s21 = sphi 0, %s18
      %s22 = sphi 0, %s19
      %s23 = sphi 0, %s20
      %s39 = sphi 0, %s41
      %s42 = sphi 0, %s39
      %s43 = sphi 0, %s42
      %s59 = sphi 0, %s43
      %s67 = sphi 0, %s69
      %s70 = sphi 0, %s67
      %s71 = sphi 0, %s70
      %s87 = sphi 0, %s71
      %s95 = sphi 0, %s97
      %s98 = sphi 0, %s95
      %s99 = sphi 0, %s98
      %s115 = sphi 0, %s99
    $region4: #{attention_forward.3} parent=1 // loop_header_branch
      %11 = sbr.rel (%p9) target = $region8
    $region5: #{attention_forward.3} parent=1 // loop_body
      %s13 = ssub.s32 %s8, 1
      %s14 = ssub.s32 %s8, 2
      %s24 = sadd.s32 1, %s17
      %p25 = scmp.ge.s32.totalorder %s24, 1
      %s26 = scalar_select %p25, 0, %s24
      %s27 = sadd.s32 1, %s16
      %s28 = scalar_select %p25, %s27, %s16
      %p29 = scmp.ge.s32.totalorder %s28, 3
      %s30 = scalar_select %p29, 0, %s28
      %s31 = sadd.s32 1, %s15
      %s32 = scalar_select %p29, %s31, %s15
      %p33 = scmp.ge.s32.totalorder %s32, 1
      %s34 = scalar_select %p33, 0, %s32
      %s35 = ssub.s32 %s15, %s34
      %s36 = ssub.s32 %s17, %s26
      %s37 = sor.u32 %s35, %s36
      %p38 = scmp.eq.s32.totalorder %s37, 0
      %s40 = sadd.s32 %s39, 1
      %s41 = scalar_select %p38, %s39, %s40
      %p44 = pneg %p38
      %p45 = scmp.eq.s32.totalorder %s8, 2
      %p46 = por %p44, %p45
      %p47 = scmp.ne.s32.totalorder %s39, %s42
      %p48 = scmp.eq.s32.totalorder %s8, 0
      %p49 = por %p47, %p48
      %p50 = scmp.ne.s32.totalorder %s39, %s42
      %p51 = scmp.eq.s32.totalorder %s13, 2
      %p52 = por %p50, %p51
      %p53 = scmp.ne.s32.totalorder %s42, %s43
      %p54 = scmp.eq.s32.totalorder %s13, 0
      %p55 = por %p53, %p54
      %p56 = scmp.ne.s32.totalorder %s42, %s43
      %p57 = scmp.eq.s32.totalorder %s14, 2
      %p58 = por %p56, %p57
      %p60 = scmp.ne.s32.totalorder %s43, %s59
      %p61 = scmp.eq.s32.totalorder %s14, 0
      %p62 = por %p60, %p61
      %s63 = ssub.s32 %s17, %s26
      %s64 = ssub.s32 %s16, %s30
      %s65 = sor.u32 %s63, %s64
      %p66 = scmp.eq.s32.totalorder %s65, 0
      %s68 = sadd.s32 %s67, 1
      %s69 = scalar_select %p66, %s67, %s68
      %p72 = pneg %p66
      %p73 = scmp.eq.s32.totalorder %s8, 2
      %p74 = por %p72, %p73
      %p75 = scmp.ne.s32.totalorder %s67, %s70
      %p76 = scmp.eq.s32.totalorder %s8, 0
      %p77 = por %p75, %p76
      %p78 = scmp.ne.s32.totalorder %s67, %s70
      %p79 = scmp.eq.s32.totalorder %s13, 2
      %p80 = por %p78, %p79
      %p81 = scmp.ne.s32.totalorder %s70, %s71
      %p82 = scmp.eq.s32.totalorder %s13, 0
      %p83 = por %p81, %p82
      %p84 = scmp.ne.s32.totalorder %s70, %s71
      %p85 = scmp.eq.s32.totalorder %s14, 2
      %p86 = por %p84, %p85
      %p88 = scmp.ne.s32.totalorder %s71, %s87
      %p89 = scmp.eq.s32.totalorder %s14, 0
      %p90 = por %p88, %p89
      %s91 = ssub.s32 %s15, %s34
      %s92 = ssub.s32 %s16, %s30
      %s93 = sor.u32 %s91, %s92
      %p94 = scmp.eq.s32.totalorder %s93, 0
      %s96 = sadd.s32 %s95, 1
      %s97 = scalar_select %p94, %s95, %s96
      %p100 = pneg %p94
      %p101 = scmp.eq.s32.totalorder %s8, 2
      %p102 = por %p100, %p101
      %p103 = scmp.ne.s32.totalorder %s95, %s98
      %p104 = scmp.eq.s32.totalorder %s8, 0
      %p105 = por %p103, %p104
      %p106 = scmp.ne.s32.totalorder %s95, %s98
      %p107 = scmp.eq.s32.totalorder %s13, 2
      %p108 = por %p106, %p107
      %p109 = scmp.ne.s32.totalorder %s98, %s99
      %p110 = scmp.eq.s32.totalorder %s13, 0
      %p111 = por %p109, %p110
      %p112 = scmp.ne.s32.totalorder %s98, %s99
      %p113 = scmp.eq.s32.totalorder %s14, 2
      %p114 = por %p112, %p113
      %p116 = scmp.ne.s32.totalorder %s99, %s115
      %p117 = scmp.eq.s32.totalorder %s14, 0
      %p118 = por %p116, %p117
      %p119 = scmp.le.s32.totalorder 1, %s8
      %p120 = scmp.lt.s32.totalorder %s8, 4
      %p121 = pnand %p119, %p120
      %p122 = pneg %p121
      // Predicated region
      $region9: #{attention_forward.3} parent=5 // pred_check
        _
      $region10: #{attention_forward.3} parent=5 // pred_check_branch
        %124 = sbr.rel (%p121) target = $region12
      $region11: #{attention_forward.3} parent=5 // pred_region
        %s125 = ssub.s32 %s8, 1
        // Predicated region
        $region13: #{attention_forward.3} parent=11 // pred_check
          %p126 = pneg %p55
        $region14: #{attention_forward.3} parent=11 // pred_check_branch
          %128 = sbr.rel (%p126) target = $region16
        $region15: #{attention_forward.3} parent=11 // pred_region
          %s129 = smul.u32 2, %s18
          %p130 = scmp.lt.s32.totalorder %s129, 1
          %s131 = scalar_select %p130, %s129, 1
          %p132 = scmp.lt.s32.totalorder %s20, 0
          %s133 = scalar_select %p132, %s20, 0
          %s134 = sadd.s32 %s133, %s131
          %s135 = smul.addr %s134, 8
          %s136 = scalar_lea.vmem %s0, %s135
          %s137 = smul.u32 2, %s18
        $region16: #{attention_forward.3} parent=11 // pred_fallthru
          _
      $region12: #{attention_forward.3} parent=5 // pred_fallthru
        _
      %p138 = scmp.lt.s32.totalorder %s8, 3
      // Predicated region
      $region17: #{attention_forward.3} parent=5 // pred_check
        %p139 = pneg %p138
      $region18: #{attention_forward.3} parent=5 // pred_check_branch
        %141 = sbr.rel (%p139) target = $region20
      $region19: #{attention_forward.3} parent=5 // pred_region
        // Predicated region
        $region21: #{attention_forward.3} parent=19 // pred_check
          %p142 = pneg %p77
        $region22: #{attention_forward.3} parent=19 // pred_check_branch
          %144 = sbr.rel (%p142) target = $region24
        $region23: #{attention_forward.3} parent=19 // pred_region
          %s145 = sand.u32 %s67, 1
          %s146 = sand.u32 %s67, 1
          %s147 = smul.addr %s146, 32
          %s148 = scalar_lea.vmem [#allocation3], %s147
          %s149 = smul.u32 4, %s17
          %s150 = smul.addr %s149, 3
          %s151 = sadd.s32 %s16, %s150
          %s152 = smul.addr %s151, 8
          %s153 = scalar_lea.vmem %s1, %s152
          // Predicated region
          $region25: #{attention_forward.3} parent=23 // pred_check
            _
          $region26: #{attention_forward.3} parent=23 // pred_check_branch
            %155 = sbr.rel (0) target = $region28
          $region27: #{attention_forward.3} parent=23 // pred_region
            // Predicated region
            $region29: #{attention_forward.3} parent=27 // pred_check
              _
            $region30: #{attention_forward.3} parent=27 // pred_check_branch
              %157 = sbr.rel (0) target = $region32
            $region31: #{attention_forward.3} parent=27 // pred_region
              // Predicated region
              $region44: #{attention_forward.3} parent=31 // pred_check
                _
              $region45: #{attention_forward.3} parent=31 // pred_check_branch
                %178 = sbr.rel (0) target = $region47
              $region46: #{attention_forward.3} parent=31 // pred_region
                loop: start=0, step=1, limit=1
                $region48: #{attention_forward.3} parent=46 // loop_pre_header
                  _
                $region49: #{attention_forward.3} parent=46 // loop_header
                  %s180 = sphi 0, %s184
                  %p181 = scmp.ge.s32.totalorder %s180, 1
                  %s185 = sphi %s153, %s153
                  %s186 = sphi %s148, %s148
                $region50: #{attention_forward.3} parent=46 // loop_header_branch
                  %183 = sbr.rel (%p181) target = $region54
                $region51: #{attention_forward.3} parent=46 // loop_body
                  %v187 = vld [vmem:[%s185] sm:$0xff]
                  %188 = vst [vmem:[%s186] sm:$0xff] %v187
                  %v189 = vld [vmem:[%s185 + $0x18] sm:$0xff]
                  %190 = vst [vmem:[%s186 + $0x8] sm:$0xff] %v189
                  %v191 = vld [vmem:[%s185 + $0x30] sm:$0xff]
                  %192 = vst [vmem:[%s186 + $0x10] sm:$0xff] %v191
                  %v193 = vld [vmem:[%s185 + $0x48] sm:$0xff]
                  %194 = vst [vmem:[%s186 + $0x18] sm:$0xff] %v193
                $region52: #{attention_forward.3} parent=46 // loop_footer
                  %s184 = sadd.s32 1, %s180
                $region53: #{attention_forward.3} parent=46 // loop_footer_branch
                  %179 = sbr.rel target = $region49
                $region54: #{attention_forward.3} parent=46 // loop_exit
                  _
              $region47: #{attention_forward.3} parent=31 // pred_fallthru
                _
              // Predicated region
              $region55: #{attention_forward.3} parent=31 // pred_check
                _
              $region56: #{attention_forward.3} parent=31 // pred_check_branch
                %196 = sbr.rel target = $region58
              $region57: #{attention_forward.3} parent=31 // pred_region
                _
              $region58: #{attention_forward.3} parent=31 // pred_fallthru
                _
            $region32: #{attention_forward.3} parent=27 // pred_fallthru
              _
            // Predicated region
            $region33: #{attention_forward.3} parent=27 // pred_check
              _
            $region34: #{attention_forward.3} parent=27 // pred_check_branch
              %159 = sbr.rel target = $region36
            $region35: #{attention_forward.3} parent=27 // pred_region
              loop: start=0, step=1, limit=1
              $region37: #{attention_forward.3} parent=35 // loop_pre_header
                _
              $region38: #{attention_forward.3} parent=35 // loop_header
                %s162 = sphi 0, %s166
                %p163 = scmp.ge.s32.totalorder %s162, 1
                %s167 = sphi %s153, %s153
                %s168 = sphi %s148, %s148
              $region39: #{attention_forward.3} parent=35 // loop_header_branch
                %165 = sbr.rel (%p163) target = $region43
              $region40: #{attention_forward.3} parent=35 // loop_body
                %v169 = vld [vmem:[%s167] sm:$0xff]
                %170 = vst [vmem:[%s168] sm:$0xff] %v169
                %v171 = vld [vmem:[%s167 + $0x18] sm:$0xff]
                %172 = vst [vmem:[%s168 + $0x8] sm:$0xff] %v171
                %v173 = vld [vmem:[%s167 + $0x30] sm:$0xff]
                %174 = vst [vmem:[%s168 + $0x10] sm:$0xff] %v173
                %v175 = vld [vmem:[%s167 + $0x48] sm:$0xff]
                %176 = vst [vmem:[%s168 + $0x18] sm:$0xff] %v175
              $region41: #{attention_forward.3} parent=35 // loop_footer
                %s166 = sadd.s32 1, %s162
              $region42: #{attention_forward.3} parent=35 // loop_footer_branch
                %161 = sbr.rel target = $region38
              $region43: #{attention_forward.3} parent=35 // loop_exit
                _
            $region36: #{attention_forward.3} parent=27 // pred_fallthru
              _
          $region28: #{attention_forward.3} parent=23 // pred_fallthru
            _
          %197 = vnop
        $region24: #{attention_forward.3} parent=19 // pred_fallthru
          _
      $region20: #{attention_forward.3} parent=5 // pred_fallthru
        _
      %p198 = scmp.le.s32.totalorder 1, %s8
      %p199 = scmp.lt.s32.totalorder %s8, 4
      %p200 = pnand %p198, %p199
      %p201 = pneg %p200
      // Predicated region
      $region59: #{attention_forward.3} parent=5 // pred_check
        _
      $region60: #{attention_forward.3} parent=5 // pred_check_branch
        %203 = sbr.rel (%p200) target = $region62
      $region61: #{attention_forward.3} parent=5 // pred_region
        %s204 = ssub.s32 %s8, 1
        %s205 = sand.u32 %s70, 1
        %s206 = sand.u32 %s70, 1
        %s207 = smul.addr %s206, 32
        %s208 = scalar_lea.vmem [#allocation3], %s207
        // Predicated region
        $region63: #{attention_forward.3} parent=61 // pred_check
          %p209 = pneg %p83
        $region64: #{attention_forward.3} parent=61 // pred_check_branch
          %211 = sbr.rel (%p209) target = $region66
        $region65: #{attention_forward.3} parent=61 // pred_region
          _
        $region66: #{attention_forward.3} parent=61 // pred_fallthru
          _
        %s212 = smul.u32 2, %s18
        %p213 = scmp.lt.s32.totalorder %s212, 1
        %s214 = scalar_select %p213, %s212, 1
        %p215 = scmp.lt.s32.totalorder %s20, 0
        %s216 = scalar_select %p215, %s20, 0
        %s217 = sadd.s32 %s216, %s214
        %s218 = smul.addr %s217, 8
        %s219 = scalar_lea.vmem %s0, %s218
        %p220 = pneg %p55
        %p221 = pneg %p52
        %s222 = sand.u32 %s70, 1
        %s223 = sand.u32 %s70, 1
        %s224 = smul.addr %s223, 32
        %s225 = scalar_lea.vmem [#allocation3], %s224
        %p226 = pneg %p83
        %p227 = pneg %p80
        %p228 = pneg %p111
        %p229 = pneg %p108
        %s230 = sand.u32 %s98, 1
        %s231 = sand.u32 %s98, 1
        %s232 = smul.addr %s231, 16
        %s233 = scalar_lea.vmem [#allocation4], %s232
        %s234 = smul.u32 2, %s18
        %p235 = scmp.lt.s32.totalorder %s234, 1
        %s236 = scalar_select %p235, %s234, 1
        %p237 = scmp.lt.s32.totalorder %s20, 0
        %s238 = scalar_select %p237, %s20, 0
        %s239 = sadd.s32 %s238, %s236
        %s240 = smul.addr %s239, 8
        %s241 = scalar_lea.vmem %s0, %s240
        %s242 = smul.u32 2, %s18
        %s243 = smul.u32 4, %s20
        %s244 = smul.u32 2, %s18
        %p245 = scmp.eq.s32.totalorder %s20, 0
        // Predicated region
        $region67: #{attention_forward.3} parent=61 // pred_check
          %p246 = pneg %p245
        $region68: #{attention_forward.3} parent=61 // pred_check_branch
          %248 = sbr.rel (%p246) target = $region70
        $region69: #{attention_forward.3} parent=61 // pred_region
          %249 = vst [vmem:[#allocation2] sm:$0xff] 0.0
          %250 = vst [vmem:[#allocation2 + $0x8] sm:$0xff] 0.0
        $region70: #{attention_forward.3} parent=61 // pred_fallthru
          _
        %v251 = vld [vmem:[#allocation2] sm:$0xff]
        %v252 = vld [vmem:[#allocation2 + $0x8] sm:$0xff]
        %v253 = vld [vmem:[%s241] sm:$0xff]
        %v254 = vld [vmem:[%s241 + $0x8] sm:$0xff]
        %v255 = vld [vmem:[%s208] sm:$0xff]
        %v256 = vld [vmem:[%s208 + $0x8] sm:$0xff]
        %v257 = vld [vmem:[%s208 + $0x10] sm:$0xff]
        %v258 = vld [vmem:[%s208 + $0x18] sm:$0xff]
        %vm259 = vcmask 261120
        %v261 = vsel %vm259, %v253, 0
        %v264 = vsel %vm259, %v254, 0
        %266 = vmatprep.subr.mxu0 0.0
        %267 = vmatpush1.msra.mxu0 %v255
        %268 = vmatprep.subr.mxu0 0.0
        %269 = vmatpush1.msra.mxu0 %v256
        %270 = vmatprep.subr.mxu0 0.0
        %271 = vmatpush1.msra.mxu0 %v257
        %272 = vmatprep.subr.mxu0 0.0
        %273 = vmatpush1.msra.mxu0 %v258
        %274 = vmatprep.subr.mxu0 0.0
        %275 = vmatpush1.msra.mxu0 0.0
        %276 = vmatprep.subr.mxu0 0.0
        %277 = vmatpush1.msra.mxu0 0.0
        %278 = vmatprep.subr.mxu0 0.0
        %279 = vmatpush1.msra.mxu0 0.0
        %280 = vmatprep.subr.mxu0 0.0
        %281 = vmatpush1.msra.mxu0 0.0
        %282 = vmatprep.subr.mxu0 0.0
        %283 = vmatpush1.msra.mxu0 0.0
        %284 = vmatprep.subr.mxu0 0.0
        %285 = vmatpush1.msra.mxu0 0.0
        %286 = vmatprep.subr.mxu0 0.0
        %287 = vmatpush1.msra.mxu0 0.0
        %288 = vmatprep.subr.mxu0 0.0
        %289 = vmatpush1.msra.mxu0 0.0
        %290 = vmatprep.subr.mxu0 0.0
        %291 = vmatpush1.msra.mxu0 0.0
        %292 = vmatprep.subr.mxu0 0.0
        %293 = vmatpush1.msra.mxu0 0.0
        %294 = vmatprep.subr.mxu0 0.0
        %295 = vmatpush1.msra.mxu0 0.0
        %296 = vmatprep.subr.mxu0 0.0
        %297 = vmatpush1.msra.mxu0 0.0
        %298 = vmatprep.subr.mxu0 0.0
        %299 = vmatpush1.msra.mxu0 0.0
        %300 = vmatprep.subr.mxu0 0.0
        %301 = vmatpush1.msra.mxu0 0.0
        %302 = vmatprep.subr.mxu0 0.0
        %303 = vmatpush1.msra.mxu0 0.0
        %304 = vmatprep.subr.mxu0 0.0
        %305 = vmatpush1.msra.mxu0 0.0
        %306 = vmatprep.subr.mxu0 0.0
        %307 = vmatpush1.msra.mxu0 0.0
        %308 = vmatprep.subr.mxu0 0.0
        %309 = vmatpush1.msra.mxu0 0.0
        %310 = vmatprep.subr.mxu0 0.0
        %311 = vmatpush1.msra.mxu0 0.0
        %312 = vmatprep.subr.mxu0 0.0
        %313 = vmatpush1.msra.mxu0 0.0
        %314 = vmatprep.subr.mxu0 0.0
        %315 = vmatpush1.msra.mxu0 0.0
        %316 = vmatprep.subr.mxu0 0.0
        %317 = vmatpush1.msra.mxu0 0.0
        %318 = vmatprep.subr.mxu0 0.0
        %319 = vmatpush1.msra.mxu0 0.0
        %320 = vmatprep.subr.mxu0 0.0
        %321 = vmatpush1.msra.mxu0 0.0
        %322 = vmatprep.subr.mxu0 0.0
        %323 = vmatpush1.msra.mxu0 0.0
        %324 = vmatprep.subr.mxu0 0.0
        %325 = vmatpush1.msra.mxu0 0.0
        %326 = vmatprep.subr.mxu0 0.0
        %327 = vmatpush1.msra.mxu0 0.0
        %328 = vmatprep.subr.mxu0 0.0
        %329 = vmatpush1.msra.mxu0 0.0
        %330 = vmatprep.mubr.f32.mxu0 0.0
        %331 = vmatmul.mubr.f32.gmra.mrb[0].mxu0 %v261
        %v332 = vpop.f32.mrb[0].mxu0
        %v333 = vadd.f32 0.0, %v332
        %v334 = vpop.f32.mrb[0].mxu0
        %335 = vmatprep.mubr.f32.mxu0 0.0
        %336 = vmatmul.mubr.f32.gmra.mrb[0].mxu0 %v264
        %v337 = vpop.f32.mrb[0].mxu0
        %v338 = vadd.f32 0.0, %v337
        %v339 = vpop.f32.mrb[0].mxu0
        %340 = vdwg.mxu0
        %v341 = vadd.f32 %v251, %v333
        %v342 = vadd.f32 %v252, %v338
        %343 = vst [vmem:[#allocation2] sm:$0xff] %v341
        %344 = vst [vmem:[#allocation2 + $0x8] sm:$0xff] %v342
        // Predicated region
        $region71: #{attention_forward.3} parent=61 // pred_check
          %p345 = pneg %p245
        $region72: #{attention_forward.3} parent=61 // pred_check_branch
          %347 = sbr.rel (%p345) target = $region74
        $region73: #{attention_forward.3} parent=61 // pred_region
          %v348 = vld [vmem:[#allocation2] sm:$0xff]
          %v349 = vld [vmem:[#allocation2 + $0x8] sm:$0xff]
          %350 = vst [vmem:[%s233] sm:$0xff] %v348
          %351 = vst [vmem:[%s233 + $0x8] sm:$0xff] %v349
        $region74: #{attention_forward.3} parent=61 // pred_fallthru
          _
        %s352 = sand.u32 %s98, 1
        %s353 = sand.u32 %s98, 1
        %s354 = smul.addr %s353, 16
        %s355 = scalar_lea.vmem [#allocation4], %s354
        // Predicated region
        $region75: #{attention_forward.3} parent=61 // pred_check
          %p356 = pneg %p108
        $region76: #{attention_forward.3} parent=61 // pred_check_branch
          %358 = sbr.rel (%p356) target = $region78
        $region77: #{attention_forward.3} parent=61 // pred_region
          %s359 = smul.u32 2, %s18
          %s360 = smul.addr %s359, 3
          %s361 = sadd.s32 %s19, %s360
          %s362 = smul.addr %s361, 8
          %s363 = scalar_lea.vmem %s2, %s362
          // Predicated region
          $region79: #{attention_forward.3} parent=77 // pred_check
            _
          $region80: #{attention_forward.3} parent=77 // pred_check_branch
            %365 = sbr.rel (0) target = $region82
          $region81: #{attention_forward.3} parent=77 // pred_region
            // Predicated region
            $region83: #{attention_forward.3} parent=81 // pred_check
              _
            $region84: #{attention_forward.3} parent=81 // pred_check_branch
              %367 = sbr.rel (0) target = $region86
            $region85: #{attention_forward.3} parent=81 // pred_region
              // Predicated region
              $region98: #{attention_forward.3} parent=85 // pred_check
                _
              $region99: #{attention_forward.3} parent=85 // pred_check_branch
                %384 = sbr.rel (0) target = $region101
              $region100: #{attention_forward.3} parent=85 // pred_region
                loop: start=0, step=1, limit=1
                $region102: #{attention_forward.3} parent=100 // loop_pre_header
                  _
                $region103: #{attention_forward.3} parent=100 // loop_header
                  %s386 = sphi 0, %s390
                  %p387 = scmp.ge.s32.totalorder %s386, 1
                  %s391 = sphi %s355, %s355
                  %s392 = sphi %s363, %s363
                $region104: #{attention_forward.3} parent=100 // loop_header_branch
                  %389 = sbr.rel (%p387) target = $region108
                $region105: #{attention_forward.3} parent=100 // loop_body
                  %v393 = vld [vmem:[%s391] sm:$0xff]
                  %394 = vst [vmem:[%s392] sm:$0xff] %v393
                  %v395 = vld [vmem:[%s391 + $0x8] sm:$0xff]
                  %396 = vst [vmem:[%s392 + $0x18] sm:$0xff] %v395
                $region106: #{attention_forward.3} parent=100 // loop_footer
                  %s390 = sadd.s32 1, %s386
                $region107: #{attention_forward.3} parent=100 // loop_footer_branch
                  %385 = sbr.rel target = $region103
                $region108: #{attention_forward.3} parent=100 // loop_exit
                  _
              $region101: #{attention_forward.3} parent=85 // pred_fallthru
                _
              // Predicated region
              $region109: #{attention_forward.3} parent=85 // pred_check
                _
              $region110: #{attention_forward.3} parent=85 // pred_check_branch
                %398 = sbr.rel target = $region112
              $region111: #{attention_forward.3} parent=85 // pred_region
                _
              $region112: #{attention_forward.3} parent=85 // pred_fallthru
                _
            $region86: #{attention_forward.3} parent=81 // pred_fallthru
              _
            // Predicated region
            $region87: #{attention_forward.3} parent=81 // pred_check
              _
            $region88: #{attention_forward.3} parent=81 // pred_check_branch
              %369 = sbr.rel target = $region90
            $region89: #{attention_forward.3} parent=81 // pred_region
              loop: start=0, step=1, limit=1
              $region91: #{attention_forward.3} parent=89 // loop_pre_header
                _
              $region92: #{attention_forward.3} parent=89 // loop_header
                %s372 = sphi 0, %s376
                %p373 = scmp.ge.s32.totalorder %s372, 1
                %s377 = sphi %s355, %s355
                %s378 = sphi %s363, %s363
              $region93: #{attention_forward.3} parent=89 // loop_header_branch
                %375 = sbr.rel (%p373) target = $region97
              $region94: #{attention_forward.3} parent=89 // loop_body
                %v379 = vld [vmem:[%s377] sm:$0xff]
                %380 = vst [vmem:[%s378] sm:$0xff] %v379
                %v381 = vld [vmem:[%s377 + $0x8] sm:$0xff]
                %382 = vst [vmem:[%s378 + $0x18] sm:$0xff] %v381
              $region95: #{attention_forward.3} parent=89 // loop_footer
                %s376 = sadd.s32 1, %s372
              $region96: #{attention_forward.3} parent=89 // loop_footer_branch
                %371 = sbr.rel target = $region92
              $region97: #{attention_forward.3} parent=89 // loop_exit
                _
            $region90: #{attention_forward.3} parent=81 // pred_fallthru
              _
          $region82: #{attention_forward.3} parent=77 // pred_fallthru
            _
          %399 = vnop
        $region78: #{attention_forward.3} parent=61 // pred_fallthru
          _
      $region62: #{attention_forward.3} parent=5 // pred_fallthru
        _
      %p400 = scmp.le.s32.totalorder 2, %s8
      // Predicated region
      $region113: #{attention_forward.3} parent=5 // pred_check
        %p401 = pneg %p400
      $region114: #{attention_forward.3} parent=5 // pred_check_branch
        %403 = sbr.rel (%p401) target = $region116
      $region115: #{attention_forward.3} parent=5 // pred_region
        %s404 = ssub.s32 %s8, 2
        // Predicated region
        $region117: #{attention_forward.3} parent=115 // pred_check
          %p405 = pneg %p114
        $region118: #{attention_forward.3} parent=115 // pred_check_branch
          %407 = sbr.rel (%p405) target = $region120
        $region119: #{attention_forward.3} parent=115 // pred_region
          %s408 = sand.u32 %s99, 1
          %s409 = sand.u32 %s99, 1
          %s410 = smul.addr %s409, 16
          %s411 = scalar_lea.vmem [#allocation4], %s410
        $region120: #{attention_forward.3} parent=115 // pred_fallthru
          _
      $region116: #{attention_forward.3} parent=5 // pred_fallthru
        _
    $region6: #{attention_forward.3} parent=1 // loop_footer
      %s12 = sadd.s32 1, %s8
    $region7: #{attention_forward.3} parent=1 // loop_footer_branch
      %7 = sbr.rel target = $region3
    $region8: #{attention_forward.3} parent=1 // loop_exit
      _

// kernel: attention_forward.5
$region0: #{attention_forward.5}
  #allocation0 [shape = 'u32[]', space=smem, size = 0x4, offset = 0x4, fixed_abs, tag = 'smem constant byte address 0x4 - core index']
  #allocation1 [shape = 'u32[144,128]{1,0:T(1,128)}', space=vmem, size = 0x12000, scoped, tag = 'internal scratch']
  #allocation2 [shape = 'f32[16,32]{1,0:T(8,128)}', space=vmem, size = 0x2000, scoped, tag = 'scratch operand']
  %s0 = inlined_call_operand.vmem [shape: f32[16,128], index: 0, kind: input, shape index: {}]
  %s1 = inlined_call_operand.vmem [shape: f32[128,32], index: 1, kind: input, shape index: {}]
  %s2 = inlined_call_operand.vmem [shape: f32[1,32], index: 2, kind: input, shape index: {}]
  %s3 = inlined_call_operand.hbm [shape: f32[16,32], index: 3, kind: output, shape index: {}]
  %s4 = sld [smem:[#allocation0]]
  $region30: #{attention_forward.5} parent=0
    _
  %s6 = ssub.s32 1, %s4
  %s7 = scalar_select 0, %s6, %s4
  $region1: #{attention_forward.5} parent=0
    #allocation3 [shape = 'u8[8192]{0}', space=vmem, size = 0x2000, scoped, tag = 'output window, operand 0, single buffered']
    #allocation4 [shape = 's32[1]{0}', space=sflag, size = 0x4, scoped, tag = 'scoped memory for attention_forward.5']
    %8 = vsyncpa [#allocation4], 0
    // Predicated region
    $region2: #{attention_forward.5} parent=1 // pred_check
      _
    $region3: #{attention_forward.5} parent=1 // pred_check_branch
      %10 = sbr.rel (0) target = $region5
    $region4: #{attention_forward.5} parent=1 // pred_region
      _
    $region5: #{attention_forward.5} parent=1 // pred_fallthru
      _
    // Predicated region
    $region6: #{attention_forward.5} parent=1 // pred_check
      _
    $region7: #{attention_forward.5} parent=1 // pred_check_branch
      %12 = sbr.rel (0) target = $region9
    $region8: #{attention_forward.5} parent=1 // pred_region
      _
    $region9: #{attention_forward.5} parent=1 // pred_fallthru
      _
    // Predicated region
    $region10: #{attention_forward.5} parent=1 // pred_check
      _
    $region11: #{attention_forward.5} parent=1 // pred_check_branch
      %14 = sbr.rel (0) target = $region13
    $region12: #{attention_forward.5} parent=1 // pred_region
      _
    $region13: #{attention_forward.5} parent=1 // pred_fallthru
      _
    %p15 = scmp.eq.s32.totalorder 0, 0
    // Predicated region
    $region14: #{attention_forward.5} parent=1 // pred_check
      %p16 = pneg %p15
    $region15: #{attention_forward.5} parent=1 // pred_check_branch
      %18 = sbr.rel (%p16) target = $region17
    $region16: #{attention_forward.5} parent=1 // pred_region
      %vm19 = vcmask 261120
      %20 = vst.msk [vmem:[#allocation2] sm:$0xff] %vm19, 0.0
      %21 = vst.msk [vmem:[#allocation2 + $0x8] sm:$0xff] %vm19, 0.0
    $region17: #{attention_forward.5} parent=1 // pred_fallthru
      _
    %v22 = vld [vmem:[#allocation2] sm:$0xff]
    %v23 = vld [vmem:[#allocation2 + $0x8] sm:$0xff]
    %v24 = vld [vmem:[%s0] sm:$0xff]
    %v25 = vld [vmem:[%s0 + $0x8] sm:$0xff]
    %v26 = vld [vmem:[%s1] sm:$0xff]
    %v27 = vld [vmem:[%s1 + $0x8] sm:$0xff]
    %v28 = vld [vmem:[%s1 + $0x10] sm:$0xff]
    %v29 = vld [vmem:[%s1 + $0x18] sm:$0xff]
    %v30 = vld [vmem:[%s1 + $0x20] sm:$0xff]
    %v31 = vld [vmem:[%s1 + $0x28] sm:$0xff]
    %v32 = vld [vmem:[%s1 + $0x30] sm:$0xff]
    %v33 = vld [vmem:[%s1 + $0x38] sm:$0xff]
    %v34 = vld [vmem:[%s1 + $0x40] sm:$0xff]
    %v35 = vld [vmem:[%s1 + $0x48] sm:$0xff]
    %v36 = vld [vmem:[%s1 + $0x50] sm:$0xff]
    %v37 = vld [vmem:[%s1 + $0x58] sm:$0xff]
    %v38 = vld [vmem:[%s1 + $0x60] sm:$0xff]
    %v39 = vld [vmem:[%s1 + $0x68] sm:$0xff]
    %v40 = vld [vmem:[%s1 + $0x70] sm:$0xff]
    %v41 = vld [vmem:[%s1 + $0x78] sm:$0xff]
    %42 = vmatprep.subr.mxu0 0.0
    %43 = vmatpush1.msra.mxu0 %v26
    %44 = vmatprep.subr.mxu0 0.0
    %45 = vmatpush1.msra.mxu0 %v27
    %46 = vmatprep.subr.mxu0 0.0
    %47 = vmatpush1.msra.mxu0 %v28
    %48 = vmatprep.subr.mxu0 0.0
    %49 = vmatpush1.msra.mxu0 %v29
    %50 = vmatprep.subr.mxu0 0.0
    %51 = vmatpush1.msra.mxu0 %v30
    %52 = vmatprep.subr.mxu0 0.0
    %53 = vmatpush1.msra.mxu0 %v31
    %54 = vmatprep.subr.mxu0 0.0
    %55 = vmatpush1.msra.mxu0 %v32
    %56 = vmatprep.subr.mxu0 0.0
    %57 = vmatpush1.msra.mxu0 %v33
    %58 = vmatprep.subr.mxu0 0.0
    %59 = vmatpush1.msra.mxu0 %v34
    %60 = vmatprep.subr.mxu0 0.0
    %61 = vmatpush1.msra.mxu0 %v35
    %62 = vmatprep.subr.mxu0 0.0
    %63 = vmatpush1.msra.mxu0 %v36
    %64 = vmatprep.subr.mxu0 0.0
    %65 = vmatpush1.msra.mxu0 %v37
    %66 = vmatprep.subr.mxu0 0.0
    %67 = vmatpush1.msra.mxu0 %v38
    %68 = vmatprep.subr.mxu0 0.0
    %69 = vmatpush1.msra.mxu0 %v39
    %70 = vmatprep.subr.mxu0 0.0
    %71 = vmatpush1.msra.mxu0 %v40
    %72 = vmatprep.subr.mxu0 0.0
    %73 = vmatpush1.msra.mxu0 %v41
    %74 = vmatprep.subr.mxu0 0.0
    %75 = vmatpush1.msra.mxu0 0.0
    %76 = vmatprep.subr.mxu0 0.0
    %77 = vmatpush1.msra.mxu0 0.0
    %78 = vmatprep.subr.mxu0 0.0
    %79 = vmatpush1.msra.mxu0 0.0
    %80 = vmatprep.subr.mxu0 0.0
    %81 = vmatpush1.msra.mxu0 0.0
    %82 = vmatprep.subr.mxu0 0.0
    %83 = vmatpush1.msra.mxu0 0.0
    %84 = vmatprep.subr.mxu0 0.0
    %85 = vmatpush1.msra.mxu0 0.0
    %86 = vmatprep.subr.mxu0 0.0
    %87 = vmatpush1.msra.mxu0 0.0
    %88 = vmatprep.subr.mxu0 0.0
    %89 = vmatpush1.msra.mxu0 0.0
    %90 = vmatprep.subr.mxu0 0.0
    %91 = vmatpush1.msra.mxu0 0.0
    %92 = vmatprep.subr.mxu0 0.0
    %93 = vmatpush1.msra.mxu0 0.0
    %94 = vmatprep.subr.mxu0 0.0
    %95 = vmatpush1.msra.mxu0 0.0
    %96 = vmatprep.subr.mxu0 0.0
    %97 = vmatpush1.msra.mxu0 0.0
    %98 = vmatprep.subr.mxu0 0.0
    %99 = vmatpush1.msra.mxu0 0.0
    %100 = vmatprep.subr.mxu0 0.0
    %101 = vmatpush1.msra.mxu0 0.0
    %102 = vmatprep.subr.mxu0 0.0
    %103 = vmatpush1.msra.mxu0 0.0
    %104 = vmatprep.subr.mxu0 0.0
    %105 = vmatpush1.msra.mxu0 0.0
    %106 = vmatprep.mubr.f32.mxu0 0.0
    %107 = vmatmul.mubr.f32.gmra.mrb[0].mxu0 %v24
    %v108 = vpop.f32.mrb[0].mxu0
    %v109 = vadd.f32 0.0, %v108
    %v110 = vpop.f32.mrb[0].mxu0
    %111 = vmatprep.mubr.f32.mxu0 0.0
    %112 = vmatmul.mubr.f32.gmra.mrb[0].mxu0 %v25
    %v113 = vpop.f32.mrb[0].mxu0
    %v114 = vadd.f32 0.0, %v113
    %v115 = vpop.f32.mrb[0].mxu0
    %116 = vdwg.mxu0
    %v117 = vadd.f32 %v22, %v109
    %v118 = vadd.f32 %v23, %v114
    %vm119 = vcmask 261120
    %120 = vst.msk [vmem:[#allocation2] sm:$0xff] %vm119, %v117
    %121 = vst.msk [vmem:[#allocation2 + $0x8] sm:$0xff] %vm119, %v118
    // Predicated region
    $region18: #{attention_forward.5} parent=1 // pred_check
      %p122 = pneg %p15
    $region19: #{attention_forward.5} parent=1 // pred_check_branch
      %124 = sbr.rel (%p122) target = $region21
    $region20: #{attention_forward.5} parent=1 // pred_region
      %v125 = vld [vmem:[#allocation2] sm:$0xff]
      %v126 = vld [vmem:[#allocation2 + $0x8] sm:$0xff]
      %v127 = vld [vmem:[%s2] sm:$0x1]
      %v129 = vlaneseq
      %v130 = vshrl.u32 %v129, 7
      %v131 = vsub.s32 0, %v130
      %v132 = vrot.slane %v127, %v131
      %v134 = vadd.f32 %v125, %v132
      %v135 = vadd.f32 %v126, %v132
      %136 = vst.msk [vmem:[#allocation3] sm:$0xff] %vm119, %v134
      %137 = vst.msk [vmem:[#allocation3 + $0x8] sm:$0xff] %vm119, %v135
    $region21: #{attention_forward.5} parent=1 // pred_fallthru
      _
    // Predicated region
    $region22: #{attention_forward.5} parent=1 // pred_check
      _
    $region23: #{attention_forward.5} parent=1 // pred_check_branch
      %139 = sbr.rel (0) target = $region25
    $region24: #{attention_forward.5} parent=1 // pred_region
      %s141 = ssub.s32 256, 256
      %142 = vsyncadd [#allocation4], %s141
      %s143 = sshll.u32 [#allocation3], 4
      %s144 = int_to_ptr.vmem [resolvable:$true] %s143
      %149 = dma.vmem_to_hbm [thread:$0]  %s144, 256, %s3, [#allocation4], 128, 128, 8
    $region25: #{attention_forward.5} parent=1 // pred_fallthru
      _
    // Predicated region
    $region26: #{attention_forward.5} parent=1 // pred_check
      _
    $region27: #{attention_forward.5} parent=1 // pred_check_branch
      %151 = sbr.rel (0) target = $region29
    $region28: #{attention_forward.5} parent=1 // pred_region
      %152 = dma.done [#allocation4], 256
    $region29: #{attention_forward.5} parent=1 // pred_fallthru
      _
    %153 = vsyncpa [#allocation4], 1

// kernel: attention_forward.4
$region0: #{attention_forward.4}
  #allocation0 [shape = 'u32[]', space=smem, size = 0x4, offset = 0x4, fixed_abs, tag = 'smem constant byte address 0x4 - core index']
  #allocation1 [shape = 'u32[144,128]{1,0:T(1,128)}', space=vmem, size = 0x12000, scoped, tag = 'internal scratch']
  #allocation2 [shape = 'f32[4,8,1]{2,1,0:T(8,128)}', space=vmem, size = 0x4000, scoped, tag = 'scratch operand']
  #allocation3 [shape = 'f32[4,8,1]{2,1,0:T(8,128)}', space=vmem, size = 0x4000, scoped, tag = 'scratch operand']
  #allocation4 [shape = 'f32[4,8,32]{2,1,0:T(8,128)}', space=vmem, size = 0x4000, scoped, tag = 'scratch operand']
  %s0 = inlined_call_operand.vmem [shape: f32[2,8,384], index: 0, kind: input, shape index: {}, may-alias: {0,1,2}]
  %s1 = inlined_call_operand.vmem [shape: f32[2,8,384], index: 1, kind: input, shape index: {}, may-alias: {0,1,2}]
  %s2 = inlined_call_operand.vmem [shape: f32[2,8,384], index: 2, kind: input, shape index: {}, may-alias: {0,1,2}]
  %s3 = inlined_call_operand.vmem [shape: f32[2,8,128], index: 3, kind: output, shape index: {}]
  %s4 = sld [smem:[#allocation0]]
  $region53: #{attention_forward.4} parent=0
    _
  %s6 = ssub.s32 1, %s4
  %s7 = scalar_select 0, %s6, %s4
  loop: start=0, step=1, limit=4
  $region2: #{attention_forward.4} parent=0 // loop_pre_header
    _
  $region3: #{attention_forward.4} parent=0 // loop_header
    %s9 = sphi 0, %s13
    %p10 = scmp.ge.s32.totalorder %s9, 4
    %s16 = sphi 0, %s35
    %s17 = sphi 0, %s31
    %s18 = sphi 0, %s27
    %s19 = sphi 0, %s16
    %s20 = sphi 0, %s17
    %s21 = sphi 0, %s18
    %s22 = sphi 0, %s19
    %s23 = sphi 0, %s20
    %s24 = sphi 0, %s21
    %s40 = sphi 0, %s42
    %s43 = sphi 0, %s40
    %s44 = sphi 0, %s43
    %s60 = sphi 0, %s44
    %s68 = sphi 0, %s70
    %s71 = sphi 0, %s68
    %s72 = sphi 0, %s71
    %s88 = sphi 0, %s72
    %s96 = sphi 0, %s98
    %s99 = sphi 0, %s96
    %s100 = sphi 0, %s99
    %s116 = sphi 0, %s100
    %s124 = sphi 0, %s126
    %s127 = sphi 0, %s124
    %s128 = sphi 0, %s127
    %s144 = sphi 0, %s128
  $region4: #{attention_forward.4} parent=0 // loop_header_branch
    %12 = sbr.rel (%p10) target = $region8
  $region5: #{attention_forward.4} parent=0 // loop_body
    %s14 = ssub.s32 %s9, 1
    %s15 = ssub.s32 %s9, 2
    %s25 = sadd.s32 1, %s18
    %p26 = scmp.ge.s32.totalorder %s25, 1
    %s27 = scalar_select %p26, 0, %s25
    %s28 = sadd.s32 1, %s17
    %s29 = scalar_select %p26, %s28, %s17
    %p30 = scmp.ge.s32.totalorder %s29, 1
    %s31 = scalar_select %p30, 0, %s29
    %s32 = sadd.s32 1, %s16
    %s33 = scalar_select %p30, %s32, %s16
    %p34 = scmp.ge.s32.totalorder %s33, 2
    %s35 = scalar_select %p34, 0, %s33
    %s36 = ssub.s32 %s16, %s35
    %s37 = ssub.s32 %s17, %s31
    %s38 = sor.u32 %s36, %s37
    %p39 = scmp.eq.s32.totalorder %s38, 0
    %s41 = sadd.s32 %s40, 1
    %s42 = scalar_select %p39, %s40, %s41
    %p45 = pneg %p39
    %p46 = scmp.eq.s32.totalorder %s9, 1
    %p47 = por %p45, %p46
    %p48 = scmp.ne.s32.totalorder %s40, %s43
    %p49 = scmp.eq.s32.totalorder %s9, 0
    %p50 = por %p48, %p49
    %p51 = scmp.ne.s32.totalorder %s40, %s43
    %p52 = scmp.eq.s32.totalorder %s14, 1
    %p53 = por %p51, %p52
    %p54 = scmp.ne.s32.totalorder %s43, %s44
    %p55 = scmp.eq.s32.totalorder %s14, 0
    %p56 = por %p54, %p55
    %p57 = scmp.ne.s32.totalorder %s43, %s44
    %p58 = scmp.eq.s32.totalorder %s15, 1
    %p59 = por %p57, %p58
    %p61 = scmp.ne.s32.totalorder %s44, %s60
    %p62 = scmp.eq.s32.totalorder %s15, 0
    %p63 = por %p61, %p62
    %s64 = ssub.s32 %s16, %s35
    %s65 = ssub.s32 %s18, %s27
    %s66 = sor.u32 %s64, %s65
    %p67 = scmp.eq.s32.totalorder %s66, 0
    %s69 = sadd.s32 %s68, 1
    %s70 = scalar_select %p67, %s68, %s69
    %p73 = pneg %p67
    %p74 = scmp.eq.s32.totalorder %s9, 1
    %p75 = por %p73, %p74
    %p76 = scmp.ne.s32.totalorder %s68, %s71
    %p77 = scmp.eq.s32.totalorder %s9, 0
    %p78 = por %p76, %p77
    %p79 = scmp.ne.s32.totalorder %s68, %s71
    %p80 = scmp.eq.s32.totalorder %s14, 1
    %p81 = por %p79, %p80
    %p82 = scmp.ne.s32.totalorder %s71, %s72
    %p83 = scmp.eq.s32.totalorder %s14, 0
    %p84 = por %p82, %p83
    %p85 = scmp.ne.s32.totalorder %s71, %s72
    %p86 = scmp.eq.s32.totalorder %s15, 1
    %p87 = por %p85, %p86
    %p89 = scmp.ne.s32.totalorder %s72, %s88
    %p90 = scmp.eq.s32.totalorder %s15, 0
    %p91 = por %p89, %p90
    %s92 = ssub.s32 %s16, %s35
    %s93 = ssub.s32 %s18, %s27
    %s94 = sor.u32 %s92, %s93
    %p95 = scmp.eq.s32.totalorder %s94, 0
    %s97 = sadd.s32 %s96, 1
    %s98 = scalar_select %p95, %s96, %s97
    %p101 = pneg %p95
    %p102 = scmp.eq.s32.totalorder %s9, 1
    %p103 = por %p101, %p102
    %p104 = scmp.ne.s32.totalorder %s96, %s99
    %p105 = scmp.eq.s32.totalorder %s9, 0
    %p106 = por %p104, %p105
    %p107 = scmp.ne.s32.totalorder %s96, %s99
    %p108 = scmp.eq.s32.totalorder %s14, 1
    %p109 = por %p107, %p108
    %p110 = scmp.ne.s32.totalorder %s99, %s100
    %p111 = scmp.eq.s32.totalorder %s14, 0
    %p112 = por %p110, %p111
    %p113 = scmp.ne.s32.totalorder %s99, %s100
    %p114 = scmp.eq.s32.totalorder %s15, 1
    %p115 = por %p113, %p114
    %p117 = scmp.ne.s32.totalorder %s100, %s116
    %p118 = scmp.eq.s32.totalorder %s15, 0
    %p119 = por %p117, %p118
    %s120 = ssub.s32 %s16, %s35
    %s121 = ssub.s32 %s17, %s31
    %s122 = sor.u32 %s120, %s121
    %p123 = scmp.eq.s32.totalorder %s122, 0
    %s125 = sadd.s32 %s124, 1
    %s126 = scalar_select %p123, %s124, %s125
    %p129 = pneg %p123
    %p130 = scmp.eq.s32.totalorder %s9, 1
    %p131 = por %p129, %p130
    %p132 = scmp.ne.s32.totalorder %s124, %s127
    %p133 = scmp.eq.s32.totalorder %s9, 0
    %p134 = por %p132, %p133
    %p135 = scmp.ne.s32.totalorder %s124, %s127
    %p136 = scmp.eq.s32.totalorder %s14, 1
    %p137 = por %p135, %p136
    %p138 = scmp.ne.s32.totalorder %s127, %s128
    %p139 = scmp.eq.s32.totalorder %s14, 0
    %p140 = por %p138, %p139
    %p141 = scmp.ne.s32.totalorder %s127, %s128
    %p142 = scmp.eq.s32.totalorder %s15, 1
    %p143 = por %p141, %p142
    %p145 = scmp.ne.s32.totalorder %s128, %s144
    %p146 = scmp.eq.s32.totalorder %s15, 0
    %p147 = por %p145, %p146
    %p148 = scmp.le.s32.totalorder 1, %s9
    %p149 = scmp.lt.s32.totalorder %s9, 3
    %p150 = pnand %p148, %p149
    %p151 = pneg %p150
    // Predicated region
    $region9: #{attention_forward.4} parent=5 // pred_check
      _
    $region10: #{attention_forward.4} parent=5 // pred_check_branch
      %153 = sbr.rel (%p150) target = $region12
    $region11: #{attention_forward.4} parent=5 // pred_region
      %s154 = ssub.s32 %s9, 1
    $region12: #{attention_forward.4} parent=5 // pred_fallthru
      _
    %p155 = scmp.lt.s32.totalorder %s9, 2
    // Predicated region
    $region13: #{attention_forward.4} parent=5 // pred_check
      %p156 = pneg %p155
    $region14: #{attention_forward.4} parent=5 // pred_check_branch
      %158 = sbr.rel (%p156) target = $region16
    $region15: #{attention_forward.4} parent=5 // pred_region
      // Predicated region
      $region17: #{attention_forward.4} parent=15 // pred_check
        %p159 = pneg %p50
      $region18: #{attention_forward.4} parent=15 // pred_check_branch
        %161 = sbr.rel (%p159) target = $region20
      $region19: #{attention_forward.4} parent=15 // pred_region
        %p162 = scmp.lt.s32.totalorder %s16, 1
        %s163 = scalar_select %p162, %s16, 1
        %p164 = scmp.lt.s32.totalorder %s17, 0
        %s165 = scalar_select %p164, %s17, 0
        %s166 = smul.addr %s165, 3
        %s167 = smul.addr %s163, 3
        %s168 = sadd.s32 %s166, %s167
        %s169 = smul.addr %s168, 8
        %s170 = scalar_lea.vmem %s0, %s169
      $region20: #{attention_forward.4} parent=15 // pred_fallthru
        _
      // Predicated region
      $region21: #{attention_forward.4} parent=15 // pred_check
        %p171 = pneg %p78
      $region22: #{attention_forward.4} parent=15 // pred_check_branch
        %173 = sbr.rel (%p171) target = $region24
      $region23: #{attention_forward.4} parent=15 // pred_region
        %p174 = scmp.lt.s32.totalorder %s16, 1
        %s175 = scalar_select %p174, %s16, 1
        %p176 = scmp.lt.s32.totalorder %s18, 0
        %s177 = scalar_select %p176, %s18, 0
        %s178 = smul.addr %s177, 3
        %s179 = sadd.s32 1, %s178
        %s180 = smul.addr %s175, 3
        %s181 = sadd.s32 %s179, %s180
        %s182 = smul.addr %s181, 8
        %s183 = scalar_lea.vmem %s1, %s182
      $region24: #{attention_forward.4} parent=15 // pred_fallthru
        _
      // Predicated region
      $region25: #{attention_forward.4} parent=15 // pred_check
        %p184 = pneg %p106
      $region26: #{attention_forward.4} parent=15 // pred_check_branch
        %186 = sbr.rel (%p184) target = $region28
      $region27: #{attention_forward.4} parent=15 // pred_region
        %p187 = scmp.lt.s32.totalorder %s16, 1
        %s188 = scalar_select %p187, %s16, 1
        %p189 = scmp.lt.s32.totalorder %s18, 0
        %s190 = scalar_select %p189, %s18, 0
        %s191 = smul.addr %s190, 3
        %s192 = sadd.s32 2, %s191
        %s193 = smul.addr %s188, 3
        %s194 = sadd.s32 %s192, %s193
        %s195 = smul.addr %s194, 8
        %s196 = scalar_lea.vmem %s2, %s195
      $region28: #{attention_forward.4} parent=15 // pred_fallthru
        _
    $region16: #{attention_forward.4} parent=5 // pred_fallthru
      _
    %p197 = scmp.le.s32.totalorder 1, %s9
    %p198 = scmp.lt.s32.totalorder %s9, 3
    %p199 = pnand %p197, %p198
    %p200 = pneg %p199
    // Predicated region
    $region29: #{attention_forward.4} parent=5 // pred_check
      _
    $region30: #{attention_forward.4} parent=5 // pred_check_branch
      %202 = sbr.rel (%p199) target = $region32
    $region31: #{attention_forward.4} parent=5 // pred_region
      %s203 = ssub.s32 %s9, 1
      %p204 = scmp.lt.s32.totalorder %s19, 1
      %s205 = scalar_select %p204, %s19, 1
      %p206 = scmp.lt.s32.totalorder %s20, 0
      %s207 = scalar_select %p206, %s20, 0
      %s208 = smul.addr %s207, 3
      %s209 = smul.addr %s205, 3
      %s210 = sadd.s32 %s208, %s209
      %s211 = smul.addr %s210, 8
      %s212 = scalar_lea.vmem %s0, %s211
      %p213 = pneg %p56
      %p214 = pneg %p53
      %p215 = scmp.lt.s32.totalorder %s19, 1
      %s216 = scalar_select %p215, %s19, 1
      %p217 = scmp.lt.s32.totalorder %s21, 0
      %s218 = scalar_select %p217, %s21, 0
      %s219 = smul.addr %s218, 3
      %s220 = sadd.s32 1, %s219
      %s221 = smul.addr %s216, 3
      %s222 = sadd.s32 %s220, %s221
      %s223 = smul.addr %s222, 8
      %s224 = scalar_lea.vmem %s1, %s223
      %p225 = pneg %p84
      %p226 = pneg %p81
      %p227 = scmp.lt.s32.totalorder %s19, 1
      %s228 = scalar_select %p227, %s19, 1
      %p229 = scmp.lt.s32.totalorder %s21, 0
      %s230 = scalar_select %p229, %s21, 0
      %s231 = smul.addr %s230, 3
      %s232 = sadd.s32 2, %s231
      %s233 = smul.addr %s228, 3
      %s234 = sadd.s32 %s232, %s233
      %s235 = smul.addr %s234, 8
      %s236 = scalar_lea.vmem %s2, %s235
      %p237 = pneg %p112
      %p238 = pneg %p109
      %p239 = pneg %p140
      %p240 = pneg %p137
      %p241 = scmp.lt.s32.totalorder %s19, 1
      %s242 = scalar_select %p241, %s19, 1
      %p243 = scmp.lt.s32.totalorder %s20, 0
      %s244 = scalar_select %p243, %s20, 0
      %s245 = sadd.s32 %s244, %s242
      %s246 = smul.addr %s245, 8
      %s247 = scalar_lea.vmem %s3, %s246
      %p248 = scmp.lt.s32.totalorder %s19, 1
      %s249 = scalar_select %p248, %s19, 1
      %p250 = scmp.lt.s32.totalorder %s20, 0
      %s251 = scalar_select %p250, %s20, 0
      %s252 = smul.addr %s251, 3
      %s253 = smul.addr %s249, 3
      %s254 = sadd.s32 %s252, %s253
      %s255 = smul.addr %s254, 8
      %s256 = scalar_lea.vmem %s0, %s255
      %p257 = scmp.lt.s32.totalorder %s19, 1
      %s258 = scalar_select %p257, %s19, 1
      %p259 = scmp.lt.s32.totalorder %s21, 0
      %s260 = scalar_select %p259, %s21, 0
      %s261 = smul.addr %s260, 3
      %s262 = sadd.s32 1, %s261
      %s263 = smul.addr %s258, 3
      %s264 = sadd.s32 %s262, %s263
      %s265 = smul.addr %s264, 8
      %s266 = scalar_lea.vmem %s1, %s265
      %p267 = scmp.lt.s32.totalorder %s19, 1
      %s268 = scalar_select %p267, %s19, 1
      %p269 = scmp.lt.s32.totalorder %s21, 0
      %s270 = scalar_select %p269, %s21, 0
      %s271 = smul.addr %s270, 3
      %s272 = sadd.s32 2, %s271
      %s273 = smul.addr %s268, 3
      %s274 = sadd.s32 %s272, %s273
      %s275 = smul.addr %s274, 8
      %s276 = scalar_lea.vmem %s2, %s275
      %p277 = scmp.lt.s32.totalorder %s19, 1
      %s278 = scalar_select %p277, %s19, 1
      %p279 = scmp.lt.s32.totalorder %s20, 0
      %s280 = scalar_select %p279, %s20, 0
      %s281 = sadd.s32 %s280, %s278
      %s282 = smul.addr %s281, 8
      %s283 = scalar_lea.vmem %s3, %s282
      %p284 = scmp.eq.s32.totalorder %s21, 0
      // Predicated region
      $region33: #{attention_forward.4} parent=31 // pred_check
        %p285 = pneg %p284
      $region34: #{attention_forward.4} parent=31 // pred_check_branch
        %287 = sbr.rel (%p285) target = $region36
      $region35: #{attention_forward.4} parent=31 // pred_region
        %vm288 = vcmask 7168
        %289 = vst.msk [vmem:[#allocation2] sm:$0xff] %vm288, -1e+30
        %290 = vst.msk [vmem:[#allocation2 + $0x8] sm:$0xff] %vm288, -1e+30
        %291 = vst.msk [vmem:[#allocation2 + $0x10] sm:$0xff] %vm288, -1e+30
        %292 = vst.msk [vmem:[#allocation2 + $0x18] sm:$0xff] %vm288, -1e+30
        %293 = vst.msk [vmem:[#allocation3] sm:$0xff] %vm288, 0.0
        %294 = vst.msk [vmem:[#allocation3 + $0x8] sm:$0xff] %vm288, 0.0
        %295 = vst.msk [vmem:[#allocation3 + $0x10] sm:$0xff] %vm288, 0.0
        %296 = vst.msk [vmem:[#allocation3 + $0x18] sm:$0xff] %vm288, 0.0
        %vm297 = vcmask 261120
        %298 = vst.msk [vmem:[#allocation4] sm:$0xff] %vm297, 0.0
        %299 = vst.msk [vmem:[#allocation4 + $0x8] sm:$0xff] %vm297, 0.0
        %300 = vst.msk [vmem:[#allocation4 + $0x10] sm:$0xff] %vm297, 0.0
        %301 = vst.msk [vmem:[#allocation4 + $0x18] sm:$0xff] %vm297, 0.0
      $region36: #{attention_forward.4} parent=31 // pred_fallthru
        _
      %v302 = vld [vmem:[%s256] sm:$0xff]
      %v303 = vld [vmem:[%s266] sm:$0xff]
      %v304 = vld [vmem:[%s276] sm:$0xff]
      %vm305 = vcmask 261120
      %v307 = vsel %vm305, %v302, 0
      %v310 = vsel %vm305, %v303, 0
      %312 = vmatprep.subr.mxu0 0.0
      %313 = vmatpush1.xpose.msra.mxu0 %v310
      %314 = vmatprep.subr.mxu0 0.0
      %315 = vmatpush1.xpose.msra.mxu0 0.0
      %316 = vmatprep.subr.mxu0 0.0
      %317 = vmatpush1.xpose.msra.mxu0 0.0
      %318 = vmatprep.subr.mxu0 0.0
      %319 = vmatpush1.xpose.msra.mxu0 0.0
      %320 = vmatprep.subr.mxu0 0.0
      %321 = vmatpush1.xpose.msra.mxu0 0.0
      %322 = vmatprep.subr.mxu0 0.0
      %323 = vmatpush1.xpose.msra.mxu0 0.0
      %324 = vmatprep.subr.mxu0 0.0
      %325 = vmatpush1.xpose.msra.mxu0 0.0
      %326 = vmatprep.subr.mxu0 0.0
      %327 = vmatpush1.xpose.msra.mxu0 0.0
      %328 = vmatprep.subr.mxu0 0.0
      %329 = vmatpush1.xpose.msra.mxu0 0.0
      %330 = vmatprep.subr.mxu0 0.0
      %331 = vmatpush1.xpose.msra.mxu0 0.0
      %332 = vmatprep.subr.mxu0 0.0
      %333 = vmatpush1.xpose.msra.mxu0 0.0
      %334 = vmatprep.subr.mxu0 0.0
      %335 = vmatpush1.xpose.msra.mxu0 0.0
      %336 = vmatprep.subr.mxu0 0.0
      %337 = vmatpush1.xpose.msra.mxu0 0.0
      %338 = vmatprep.subr.mxu0 0.0
      %339 = vmatpush1.xpose.msra.mxu0 0.0
      %340 = vmatprep.subr.mxu0 0.0
      %341 = vmatpush1.xpose.msra.mxu0 0.0
      %342 = vmatprep.subr.mxu0 0.0
      %343 = vmatpush1.xpose.msra.mxu0 0.0
      %344 = vmatprep.subr.mxu0 0.0
      %345 = vmatpush1.xpose.msra.mxu0 0.0
      %346 = vmatprep.subr.mxu0 0.0
      %347 = vmatpush1.xpose.msra.mxu0 0.0
      %348 = vmatprep.subr.mxu0 0.0
      %349 = vmatpush1.xpose.msra.mxu0 0.0
      %350 = vmatprep.subr.mxu0 0.0
      %351 = vmatpush1.xpose.msra.mxu0 0.0
      %352 = vmatprep.subr.mxu0 0.0
      %353 = vmatpush1.xpose.msra.mxu0 0.0
      %354 = vmatprep.subr.mxu0 0.0
      %355 = vmatpush1.xpose.msra.mxu0 0.0
      %356 = vmatprep.subr.mxu0 0.0
      %357 = vmatpush1.xpose.msra.mxu0 0.0
      %358 = vmatprep.subr.mxu0 0.0
      %359 = vmatpush1.xpose.msra.mxu0 0.0
      %360 = vmatprep.subr.mxu0 0.0
      %361 = vmatpush1.xpose.msra.mxu0 0.0
      %362 = vmatprep.subr.mxu0 0.0
      %363 = vmatpush1.xpose.msra.mxu0 0.0
      %364 = vmatprep.subr.mxu0 0.0
      %365 = vmatpush1.xpose.msra.mxu0 0.0
      %366 = vmatprep.subr.mxu0 0.0
      %367 = vmatpush1.xpose.msra.mxu0 0.0
      %368 = vmatprep.subr.mxu0 0.0
      %369 = vmatpush1.xpose.msra.mxu0 0.0
      %370 = vmatprep.subr.mxu0 0.0
      %371 = vmatpush1.xpose.msra.mxu0 0.0
      %372 = vmatprep.subr.mxu0 0.0
      %373 = vmatpush1.xpose.msra.mxu0 0.0
      %374 = vmatprep.subr.mxu0 0.0
      %375 = vmatpush1.xpose.msra.mxu0 0.0
      %376 = vmatprep.mubr.f32.mxu0 0.0
      %377 = vmatmul.mubr.f32.gmra.mrb[0].mxu0 %v307
      %v378 = vpop.f32.mrb[0].mxu0
      %v379 = vadd.f32 0.0, %v378
      %v380 = vpop.f32.mrb[0].mxu0
      %381 = vdwg.mxu0
      %v382 = vld [vmem:[#allocation2] sm:$0xff]
      %v383 = vld [vmem:[#allocation3] sm:$0xff]
      %vm384 = vcmask 64512
      %v385 = vsel %vm384, %v379, -inf
      %386 = vmax.xlane.f32.xlu0 %v385
      %v387 = vpop.xlane.xlu0 %386
      %v388 = vmax.f32 %v382, %v387
      %v389 = vsub.f32 %v382, %v388
      %v390 = vmul.f32 %v389, 1.442695
      %v391 = vpow.pop %v390
      %393 = vset.pattern.permute.xlu0 0
      %394 = vperm.xlu0 %393, %v388
      %v395 = vpop.permute.xlu0 %394
      %v397 = vsub.f32 %v379, %v395
      %v398 = vmul.f32 %v397, 1.442695
      %v399 = vpow.pop %v398
      %v400 = vmul.f32 %v391, %v383
      %v401 = vsel %vm384, %v399, 0.0
      %402 = vadd.xlane.f32.xlu0 %v401
      %v403 = vpop.xlane.xlu0 %402
      %v404 = vadd.f32 %v400, %v403
      %vm405 = vcmask 7168
      %406 = vst.msk [vmem:[#allocation3] sm:$0xff] %vm405, %v404
      %v408 = vsel %vm384, %v399, 0
      %410 = vmatprep.subr.mxu0 0.0
      %411 = vmatpush1.msra.mxu0 %v304
      %412 = vmatprep.subr.mxu0 0.0
      %413 = vmatpush1.msra.mxu0 0.0
      %414 = vmatprep.subr.mxu0 0.0
      %415 = vmatpush1.msra.mxu0 0.0
      %416 = vmatprep.subr.mxu0 0.0
      %417 = vmatpush1.msra.mxu0 0.0
      %418 = vmatprep.subr.mxu0 0.0
      %419 = vmatpush1.msra.mxu0 0.0
      %420 = vmatprep.subr.mxu0 0.0
      %421 = vmatpush1.msra.mxu0 0.0
      %422 = vmatprep.subr.mxu0 0.0
      %423 = vmatpush1.msra.mxu0 0.0
      %424 = vmatprep.subr.mxu0 0.0
      %425 = vmatpush1.msra.mxu0 0.0
      %426 = vmatprep.subr.mxu0 0.0
      %427 = vmatpush1.msra.mxu0 0.0
      %428 = vmatprep.subr.mxu0 0.0
      %429 = vmatpush1.msra.mxu0 0.0
      %430 = vmatprep.subr.mxu0 0.0
      %431 = vmatpush1.msra.mxu0 0.0
      %432 = vmatprep.subr.mxu0 0.0
      %433 = vmatpush1.msra.mxu0 0.0
      %434 = vmatprep.subr.mxu0 0.0
      %435 = vmatpush1.msra.mxu0 0.0
      %436 = vmatprep.subr.mxu0 0.0
      %437 = vmatpush1.msra.mxu0 0.0
      %438 = vmatprep.subr.mxu0 0.0
      %439 = vmatpush1.msra.mxu0 0.0
      %440 = vmatprep.subr.mxu0 0.0
      %441 = vmatpush1.msra.mxu0 0.0
      %442 = vmatprep.subr.mxu0 0.0
      %443 = vmatpush1.msra.mxu0 0.0
      %444 = vmatprep.subr.mxu0 0.0
      %445 = vmatpush1.msra.mxu0 0.0
      %446 = vmatprep.subr.mxu0 0.0
      %447 = vmatpush1.msra.mxu0 0.0
      %448 = vmatprep.subr.mxu0 0.0
      %449 = vmatpush1.msra.mxu0 0.0
      %450 = vmatprep.subr.mxu0 0.0
      %451 = vmatpush1.msra.mxu0 0.0
      %452 = vmatprep.subr.mxu0 0.0
      %453 = vmatpush1.msra.mxu0 0.0
      %454 = vmatprep.subr.mxu0 0.0
      %455 = vmatpush1.msra.mxu0 0.0
      %456 = vmatprep.subr.mxu0 0.0
      %457 = vmatpush1.msra.mxu0 0.0
      %458 = vmatprep.subr.mxu0 0.0
      %459 = vmatpush1.msra.mxu0 0.0
      %460 = vmatprep.subr.mxu0 0.0
      %461 = vmatpush1.msra.mxu0 0.0
      %462 = vmatprep.subr.mxu0 0.0
      %463 = vmatpush1.msra.mxu0 0.0
      %464 = vmatprep.subr.mxu0 0.0
      %465 = vmatpush1.msra.mxu0 0.0
      %466 = vmatprep.subr.mxu0 0.0
      %467 = vmatpush1.msra.mxu0 0.0
      %468 = vmatprep.subr.mxu0 0.0
      %469 = vmatpush1.msra.mxu0 0.0
      %470 = vmatprep.subr.mxu0 0.0
      %471 = vmatpush1.msra.mxu0 0.0
      %472 = vmatprep.subr.mxu0 0.0
      %473 = vmatpush1.msra.mxu0 0.0
      %474 = vmatprep.mubr.f32.mxu0 0.0
      %475 = vmatmul.mubr.f32.gmra.mrb[0].mxu0 %v408
      %v476 = vpop.f32.mrb[0].mxu0
      %v477 = vadd.f32 0.0, %v476
      %v478 = vpop.f32.mrb[0].mxu0
      %479 = vdwg.mxu0
      %v480 = vld [vmem:[#allocation4] sm:$0xff]
      %482 = vset.pattern.permute.xlu0 0
      %483 = vperm.xlu0 %482, %v391
      %v484 = vpop.permute.xlu0 %483
      %v486 = vmul.f32 %v484, %v480
      %v487 = vadd.f32 %v486, %v477
      %488 = vst.msk [vmem:[#allocation4] sm:$0xff] %vm305, %v487
      %489 = vst.msk [vmem:[#allocation2] sm:$0xff] %vm405, %v388
      %v490 = vld [vmem:[%s256] sm:$0xff]
      %v491 = vld [vmem:[%s266] sm:$0xff]
      %v492 = vld [vmem:[%s276] sm:$0xff]
      %494 = vrot.lane.b32.xlu0 %v490, 96
      %v495 = vpop.permute.xlu0 %494
      %497 = vrot.lane.b32.xlu0 %v491, 96
      %v498 = vpop.permute.xlu0 %497
      %v499 = vsel %vm305, %v495, 0
      %v501 = vsel %vm305, %v498, 0
      %503 = vmatprep.subr.mxu0 0.0
      %504 = vmatpush1.xpose.msra.mxu0 %v501
      %505 = vmatprep.subr.mxu0 0.0
      %506 = vmatpush1.xpose.msra.mxu0 0.0
      %507 = vmatprep.subr.mxu0 0.0
      %508 = vmatpush1.xpose.msra.mxu0 0.0
      %509 = vmatprep.subr.mxu0 0.0
      %510 = vmatpush1.xpose.msra.mxu0 0.0
      %511 = vmatprep.subr.mxu0 0.0
      %512 = vmatpush1.xpose.msra.mxu0 0.0
      %513 = vmatprep.subr.mxu0 0.0
      %514 = vmatpush1.xpose.msra.mxu0 0.0
      %515 = vmatprep.subr.mxu0 0.0
      %516 = vmatpush1.xpose.msra.mxu0 0.0
      %517 = vmatprep.subr.mxu0 0.0
      %518 = vmatpush1.xpose.msra.mxu0 0.0
      %519 = vmatprep.subr.mxu0 0.0
      %520 = vmatpush1.xpose.msra.mxu0 0.0
      %521 = vmatprep.subr.mxu0 0.0
      %522 = vmatpush1.xpose.msra.mxu0 0.0
      %523 = vmatprep.subr.mxu0 0.0
      %524 = vmatpush1.xpose.msra.mxu0 0.0
      %525 = vmatprep.subr.mxu0 0.0
      %526 = vmatpush1.xpose.msra.mxu0 0.0
      %527 = vmatprep.subr.mxu0 0.0
      %528 = vmatpush1.xpose.msra.mxu0 0.0
      %529 = vmatprep.subr.mxu0 0.0
      %530 = vmatpush1.xpose.msra.mxu0 0.0
      %531 = vmatprep.subr.mxu0 0.0
      %532 = vmatpush1.xpose.msra.mxu0 0.0
      %533 = vmatprep.subr.mxu0 0.0
      %534 = vmatpush1.xpose.msra.mxu0 0.0
      %535 = vmatprep.subr.mxu0 0.0
      %536 = vmatpush1.xpose.msra.mxu0 0.0
      %537 = vmatprep.subr.mxu0 0.0
      %538 = vmatpush1.xpose.msra.mxu0 0.0
      %539 = vmatprep.subr.mxu0 0.0
      %540 = vmatpush1.xpose.msra.mxu0 0.0
      %541 = vmatprep.subr.mxu0 0.0
      %542 = vmatpush1.xpose.msra.mxu0 0.0
      %543 = vmatprep.subr.mxu0 0.0
      %544 = vmatpush1.xpose.msra.mxu0 0.0
      %545 = vmatprep.subr.mxu0 0.0
      %546 = vmatpush1.xpose.msra.mxu0 0.0
      %547 = vmatprep.subr.mxu0 0.0
      %548 = vmatpush1.xpose.msra.mxu0 0.0
      %549 = vmatprep.subr.mxu0 0.0
      %550 = vmatpush1.xpose.msra.mxu0 0.0
      %551 = vmatprep.subr.mxu0 0.0
      %552 = vmatpush1.xpose.msra.mxu0 0.0
      %553 = vmatprep.subr.mxu0 0.0
      %554 = vmatpush1.xpose.msra.mxu0 0.0
      %555 = vmatprep.subr.mxu0 0.0
      %556 = vmatpush1.xpose.msra.mxu0 0.0
      %557 = vmatprep.subr.mxu0 0.0
      %558 = vmatpush1.xpose.msra.mxu0 0.0
      %559 = vmatprep.subr.mxu0 0.0
      %560 = vmatpush1.xpose.msra.mxu0 0.0
      %561 = vmatprep.subr.mxu0 0.0
      %562 = vmatpush1.xpose.msra.mxu0 0.0
      %563 = vmatprep.subr.mxu0 0.0
      %564 = vmatpush1.xpose.msra.mxu0 0.0
      %565 = vmatprep.subr.mxu0 0.0
      %566 = vmatpush1.xpose.msra.mxu0 0.0
      %567 = vmatprep.mubr.f32.mxu0 0.0
      %568 = vmatmul.mubr.f32.gmra.mrb[0].mxu0 %v499
      %v569 = vpop.f32.mrb[0].mxu0
      %v570 = vadd.f32 0.0, %v569
      %v571 = vpop.f32.mrb[0].mxu0
      %572 = vdwg.mxu0
      %s573 = scalar_lea.vmem [#allocation2], 8
      %v574 = vld [vmem:[%s573] sm:$0xff]
      %s575 = scalar_lea.vmem [#allocation3], 8
      %v576 = vld [vmem:[%s575] sm:$0xff]
      %v577 = vsel %vm384, %v570, -inf
      %578 = vmax.xlane.f32.xlu0 %v577
      %v579 = vpop.xlane.xlu0 %578
      %v580 = vmax.f32 %v574, %v579
      %v581 = vsub.f32 %v574, %v580
      %v582 = vmul.f32 %v581, 1.442695
      %v583 = vpow.pop %v582
      %585 = vset.pattern.permute.xlu0 0
      %586 = vperm.xlu0 %585, %v580
      %v587 = vpop.permute.xlu0 %586
      %v589 = vsub.f32 %v570, %v587
      %v590 = vmul.f32 %v589, 1.442695
      %v591 = vpow.pop %v590
      %v592 = vmul.f32 %v583, %v576
      %v593 = vsel %vm384, %v591, 0.0
      %594 = vadd.xlane.f32.xlu0 %v593
      %v595 = vpop.xlane.xlu0 %594
      %v596 = vadd.f32 %v592, %v595
      %597 = vst.msk [vmem:[%s575] sm:$0xff] %vm405, %v596
      %599 = vrot.lane.b32.xlu0 %v492, 96
      %v600 = vpop.permute.xlu0 %599
      %v603 = vsel %vm384, %v591, 0
      %605 = vmatprep.subr.mxu0 0.0
      %606 = vmatpush1.msra.mxu0 %v600
      %607 = vmatprep.subr.mxu0 0.0
      %608 = vmatpush1.msra.mxu0 0.0
      %609 = vmatprep.subr.mxu0 0.0
      %610 = vmatpush1.msra.mxu0 0.0
      %611 = vmatprep.subr.mxu0 0.0
      %612 = vmatpush1.msra.mxu0 0.0
      %613 = vmatprep.subr.mxu0 0.0
      %614 = vmatpush1.msra.mxu0 0.0
      %615 = vmatprep.subr.mxu0 0.0
      %616 = vmatpush1.msra.mxu0 0.0
      %617 = vmatprep.subr.mxu0 0.0
      %618 = vmatpush1.msra.mxu0 0.0
      %619 = vmatprep.subr.mxu0 0.0
      %620 = vmatpush1.msra.mxu0 0.0
      %621 = vmatprep.subr.mxu0 0.0
      %622 = vmatpush1.msra.mxu0 0.0
      %623 = vmatprep.subr.mxu0 0.0
      %624 = vmatpush1.msra.mxu0 0.0
      %625 = vmatprep.subr.mxu0 0.0
      %626 = vmatpush1.msra.mxu0 0.0
      %627 = vmatprep.subr.mxu0 0.0
      %628 = vmatpush1.msra.mxu0 0.0
      %629 = vmatprep.subr.mxu0 0.0
      %630 = vmatpush1.msra.mxu0 0.0
      %631 = vmatprep.subr.mxu0 0.0
      %632 = vmatpush1.msra.mxu0 0.0
      %633 = vmatprep.subr.mxu0 0.0
      %634 = vmatpush1.msra.mxu0 0.0
      %635 = vmatprep.subr.mxu0 0.0
      %636 = vmatpush1.msra.mxu0 0.0
      %637 = vmatprep.subr.mxu0 0.0
      %638 = vmatpush1.msra.mxu0 0.0
      %639 = vmatprep.subr.mxu0 0.0
      %640 = vmatpush1.msra.mxu0 0.0
      %641 = vmatprep.subr.mxu0 0.0
      %642 = vmatpush1.msra.mxu0 0.0
      %643 = vmatprep.subr.mxu0 0.0
      %644 = vmatpush1.msra.mxu0 0.0
      %645 = vmatprep.subr.mxu0 0.0
      %646 = vmatpush1.msra.mxu0 0.0
      %647 = vmatprep.subr.mxu0 0.0
      %648 = vmatpush1.msra.mxu0 0.0
      %649 = vmatprep.subr.mxu0 0.0
      %650 = vmatpush1.msra.mxu0 0.0
      %651 = vmatprep.subr.mxu0 0.0
      %652 = vmatpush1.msra.mxu0 0.0
      %653 = vmatprep.subr.mxu0 0.0
      %654 = vmatpush1.msra.mxu0 0.0
      %655 = vmatprep.subr.mxu0 0.0
      %656 = vmatpush1.msra.mxu0 0.0
      %657 = vmatprep.subr.mxu0 0.0
      %658 = vmatpush1.msra.mxu0 0.0
      %659 = vmatprep.subr.mxu0 0.0
      %660 = vmatpush1.msra.mxu0 0.0
      %661 = vmatprep.subr.mxu0 0.0
      %662 = vmatpush1.msra.mxu0 0.0
      %663 = vmatprep.subr.mxu0 0.0
      %664 = vmatpush1.msra.mxu0 0.0
      %665 = vmatprep.subr.mxu0 0.0
      %666 = vmatpush1.msra.mxu0 0.0
      %667 = vmatprep.subr.mxu0 0.0
      %668 = vmatpush1.msra.mxu0 0.0
      %669 = vmatprep.mubr.f32.mxu0 0.0
      %670 = vmatmul.mubr.f32.gmra.mrb[0].mxu0 %v603
      %v671 = vpop.f32.mrb[0].mxu0
      %v672 = vadd.f32 0.0, %v671
      %v673 = vpop.f32.mrb[0].mxu0
      %674 = vdwg.mxu0
      %s675 = scalar_lea.vmem [#allocation4], 8
      %v676 = vld [vmem:[%s675] sm:$0xff]
      %678 = vset.pattern.permute.xlu0 0
      %679 = vperm.xlu0 %678, %v583
      %v680 = vpop.permute.xlu0 %679
      %v682 = vmul.f32 %v680, %v676
      %v683 = vadd.f32 %v682, %v672
      %684 = vst.msk [vmem:[%s675] sm:$0xff] %vm305, %v683
      %685 = vst.msk [vmem:[%s573] sm:$0xff] %vm405, %v580
      %v686 = vld [vmem:[%s256] sm:$0xff]
      %v687 = vld [vmem:[%s266] sm:$0xff]
      %v688 = vld [vmem:[%s276] sm:$0xff]
      %690 = vrot.lane.b32.xlu0 %v686, 64
      %v691 = vpop.permute.xlu0 %690
      %693 = vrot.lane.b32.xlu0 %v687, 64
      %v694 = vpop.permute.xlu0 %693
      %v695 = vsel %vm305, %v691, 0
      %v697 = vsel %vm305, %v694, 0
      %699 = vmatprep.subr.mxu0 0.0
      %700 = vmatpush1.xpose.msra.mxu0 %v697
      %701 = vmatprep.subr.mxu0 0.0
      %702 = vmatpush1.xpose.msra.mxu0 0.0
      %703 = vmatprep.subr.mxu0 0.0
      %704 = vmatpush1.xpose.msra.mxu0 0.0
      %705 = vmatprep.subr.mxu0 0.0
      %706 = vmatpush1.xpose.msra.mxu0 0.0
      %707 = vmatprep.subr.mxu0 0.0
      %708 = vmatpush1.xpose.msra.mxu0 0.0
      %709 = vmatprep.subr.mxu0 0.0
      %710 = vmatpush1.xpose.msra.mxu0 0.0
      %711 = vmatprep.subr.mxu0 0.0
      %712 = vmatpush1.xpose.msra.mxu0 0.0
      %713 = vmatprep.subr.mxu0 0.0
      %714 = vmatpush1.xpose.msra.mxu0 0.0
      %715 = vmatprep.subr.mxu0 0.0
      %716 = vmatpush1.xpose.msra.mxu0 0.0
      %717 = vmatprep.subr.mxu0 0.0
      %718 = vmatpush1.xpose.msra.mxu0 0.0
      %719 = vmatprep.subr.mxu0 0.0
      %720 = vmatpush1.xpose.msra.mxu0 0.0
      %721 = vmatprep.subr.mxu0 0.0
      %722 = vmatpush1.xpose.msra.mxu0 0.0
      %723 = vmatprep.subr.mxu0 0.0
      %724 = vmatpush1.xpose.msra.mxu0 0.0
      %725 = vmatprep.subr.mxu0 0.0
      %726 = vmatpush1.xpose.msra.mxu0 0.0
      %727 = vmatprep.subr.mxu0 0.0
      %728 = vmatpush1.xpose.msra.mxu0 0.0
      %729 = vmatprep.subr.mxu0 0.0
      %730 = vmatpush1.xpose.msra.mxu0 0.0
      %731 = vmatprep.subr.mxu0 0.0
      %732 = vmatpush1.xpose.msra.mxu0 0.0
      %733 = vmatprep.subr.mxu0 0.0
      %734 = vmatpush1.xpose.msra.mxu0 0.0
      %735 = vmatprep.subr.mxu0 0.0
      %736 = vmatpush1.xpose.msra.mxu0 0.0
      %737 = vmatprep.subr.mxu0 0.0
      %738 = vmatpush1.xpose.msra.mxu0 0.0
      %739 = vmatprep.subr.mxu0 0.0
      %740 = vmatpush1.xpose.msra.mxu0 0.0
      %741 = vmatprep.subr.mxu0 0.0
      %742 = vmatpush1.xpose.msra.mxu0 0.0
      %743 = vmatprep.subr.mxu0 0.0
      %744 = vmatpush1.xpose.msra.mxu0 0.0
      %745 = vmatprep.subr.mxu0 0.0
      %746 = vmatpush1.xpose.msra.mxu0 0.0
      %747 = vmatprep.subr.mxu0 0.0
      %748 = vmatpush1.xpose.msra.mxu0 0.0
      %749 = vmatprep.subr.mxu0 0.0
      %750 = vmatpush1.xpose.msra.mxu0 0.0
      %751 = vmatprep.subr.mxu0 0.0
      %752 = vmatpush1.xpose.msra.mxu0 0.0
      %753 = vmatprep.subr.mxu0 0.0
      %754 = vmatpush1.xpose.msra.mxu0 0.0
      %755 = vmatprep.subr.mxu0 0.0
      %756 = vmatpush1.xpose.msra.mxu0 0.0
      %757 = vmatprep.subr.mxu0 0.0
      %758 = vmatpush1.xpose.msra.mxu0 0.0
      %759 = vmatprep.subr.mxu0 0.0
      %760 = vmatpush1.xpose.msra.mxu0 0.0
      %761 = vmatprep.subr.mxu0 0.0
      %762 = vmatpush1.xpose.msra.mxu0 0.0
      %763 = vmatprep.mubr.f32.mxu0 0.0
      %764 = vmatmul.mubr.f32.gmra.mrb[0].mxu0 %v695
      %v765 = vpop.f32.mrb[0].mxu0
      %v766 = vadd.f32 0.0, %v765
      %v767 = vpop.f32.mrb[0].mxu0
      %768 = vdwg.mxu0
      %s769 = scalar_lea.vmem [#allocation2], 16
      %v770 = vld [vmem:[%s769] sm:$0xff]
      %s771 = scalar_lea.vmem [#allocation3], 16
      %v772 = vld [vmem:[%s771] sm:$0xff]
      %v773 = vsel %vm384, %v766, -inf
      %774 = vmax.xlane.f32.xlu0 %v773
      %v775 = vpop.xlane.xlu0 %774
      %v776 = vmax.f32 %v770, %v775
      %v777 = vsub.f32 %v770, %v776
      %v778 = vmul.f32 %v777, 1.442695
      %v779 = vpow.pop %v778
      %781 = vset.pattern.permute.xlu0 0
      %782 = vperm.xlu0 %781, %v776
      %v783 = vpop.permute.xlu0 %782
      %v785 = vsub.f32 %v766, %v783
      %v786 = vmul.f32 %v785, 1.442695
      %v787 = vpow.pop %v786
      %v788 = vmul.f32 %v779, %v772
      %v789 = vsel %vm384, %v787, 0.0
      %790 = vadd.xlane.f32.xlu0 %v789
      %v791 = vpop.xlane.xlu0 %790
      %v792 = vadd.f32 %v788, %v791
      %793 = vst.msk [vmem:[%s771] sm:$0xff] %vm405, %v792
      %795 = vrot.lane.b32.xlu0 %v688, 64
      %v796 = vpop.permute.xlu0 %795
      %v799 = vsel %vm384, %v787, 0
      %801 = vmatprep.subr.mxu0 0.0
      %802 = vmatpush1.msra.mxu0 %v796
      %803 = vmatprep.subr.mxu0 0.0
      %804 = vmatpush1.msra.mxu0 0.0
      %805 = vmatprep.subr.mxu0 0.0
      %806 = vmatpush1.msra.mxu0 0.0
      %807 = vmatprep.subr.mxu0 0.0
      %808 = vmatpush1.msra.mxu0 0.0
      %809 = vmatprep.subr.mxu0 0.0
      %810 = vmatpush1.msra.mxu0 0.0
      %811 = vmatprep.subr.mxu0 0.0
      %812 = vmatpush1.msra.mxu0 0.0
      %813 = vmatprep.subr.mxu0 0.0
      %814 = vmatpush1.msra.mxu0 0.0
      %815 = vmatprep.subr.mxu0 0.0
      %816 = vmatpush1.msra.mxu0 0.0
      %817 = vmatprep.subr.mxu0 0.0
      %818 = vmatpush1.msra.mxu0 0.0
      %819 = vmatprep.subr.mxu0 0.0
      %820 = vmatpush1.msra.mxu0 0.0
      %821 = vmatprep.subr.mxu0 0.0
      %822 = vmatpush1.msra.mxu0 0.0
      %823 = vmatprep.subr.mxu0 0.0
      %824 = vmatpush1.msra.mxu0 0.0
      %825 = vmatprep.subr.mxu0 0.0
      %826 = vmatpush1.msra.mxu0 0.0
      %827 = vmatprep.subr.mxu0 0.0
      %828 = vmatpush1.msra.mxu0 0.0
      %829 = vmatprep.subr.mxu0 0.0
      %830 = vmatpush1.msra.mxu0 0.0
      %831 = vmatprep.subr.mxu0 0.0
      %832 = vmatpush1.msra.mxu0 0.0
      %833 = vmatprep.subr.mxu0 0.0
      %834 = vmatpush1.msra.mxu0 0.0
      %835 = vmatprep.subr.mxu0 0.0
      %836 = vmatpush1.msra.mxu0 0.0
      %837 = vmatprep.subr.mxu0 0.0
      %838 = vmatpush1.msra.mxu0 0.0
      %839 = vmatprep.subr.mxu0 0.0
      %840 = vmatpush1.msra.mxu0 0.0
      %841 = vmatprep.subr.mxu0 0.0
      %842 = vmatpush1.msra.mxu0 0.0
      %843 = vmatprep.subr.mxu0 0.0
      %844 = vmatpush1.msra.mxu0 0.0
      %845 = vmatprep.subr.mxu0 0.0
      %846 = vmatpush1.msra.mxu0 0.0
      %847 = vmatprep.subr.mxu0 0.0
      %848 = vmatpush1.msra.mxu0 0.0
      %849 = vmatprep.subr.mxu0 0.0
      %850 = vmatpush1.msra.mxu0 0.0
      %851 = vmatprep.subr.mxu0 0.0
      %852 = vmatpush1.msra.mxu0 0.0
      %853 = vmatprep.subr.mxu0 0.0
      %854 = vmatpush1.msra.mxu0 0.0
      %855 = vmatprep.subr.mxu0 0.0
      %856 = vmatpush1.msra.mxu0 0.0
      %857 = vmatprep.subr.mxu0 0.0
      %858 = vmatpush1.msra.mxu0 0.0
      %859 = vmatprep.subr.mxu0 0.0
      %860 = vmatpush1.msra.mxu0 0.0
      %861 = vmatprep.subr.mxu0 0.0
      %862 = vmatpush1.msra.mxu0 0.0
      %863 = vmatprep.subr.mxu0 0.0
      %864 = vmatpush1.msra.mxu0 0.0
      %865 = vmatprep.mubr.f32.mxu0 0.0
      %866 = vmatmul.mubr.f32.gmra.mrb[0].mxu0 %v799
      %v867 = vpop.f32.mrb[0].mxu0
      %v868 = vadd.f32 0.0, %v867
      %v869 = vpop.f32.mrb[0].mxu0
      %870 = vdwg.mxu0
      %s871 = scalar_lea.vmem [#allocation4], 16
      %v872 = vld [vmem:[%s871] sm:$0xff]
      %874 = vset.pattern.permute.xlu0 0
      %875 = vperm.xlu0 %874, %v779
      %v876 = vpop.permute.xlu0 %875
      %v878 = vmul.f32 %v876, %v872
      %v879 = vadd.f32 %v878, %v868
      %880 = vst.msk [vmem:[%s871] sm:$0xff] %vm305, %v879
      %881 = vst.msk [vmem:[%s769] sm:$0xff] %vm405, %v776
      %v882 = vld [vmem:[%s256] sm:$0xff]
      %v883 = vld [vmem:[%s266] sm:$0xff]
      %v884 = vld [vmem:[%s276] sm:$0xff]
      %886 = vrot.lane.b32.xlu0 %v882, 32
      %v887 = vpop.permute.xlu0 %886
      %889 = vrot.lane.b32.xlu0 %v883, 32
      %v890 = vpop.permute.xlu0 %889
      %v891 = vsel %vm305, %v887, 0
      %v893 = vsel %vm305, %v890, 0
      %895 = vmatprep.subr.mxu0 0.0
      %896 = vmatpush1.xpose.msra.mxu0 %v893
      %897 = vmatprep.subr.mxu0 0.0
      %898 = vmatpush1.xpose.msra.mxu0 0.0
      %899 = vmatprep.subr.mxu0 0.0
      %900 = vmatpush1.xpose.msra.mxu0 0.0
      %901 = vmatprep.subr.mxu0 0.0
      %902 = vmatpush1.xpose.msra.mxu0 0.0
      %903 = vmatprep.subr.mxu0 0.0
      %904 = vmatpush1.xpose.msra.mxu0 0.0
      %905 = vmatprep.subr.mxu0 0.0
      %906 = vmatpush1.xpose.msra.mxu0 0.0
      %907 = vmatprep.subr.mxu0 0.0
      %908 = vmatpush1.xpose.msra.mxu0 0.0
      %909 = vmatprep.subr.mxu0 0.0
      %910 = vmatpush1.xpose.msra.mxu0 0.0
      %911 = vmatprep.subr.mxu0 0.0
      %912 = vmatpush1.xpose.msra.mxu0 0.0
      %913 = vmatprep.subr.mxu0 0.0
      %914 = vmatpush1.xpose.msra.mxu0 0.0
      %915 = vmatprep.subr.mxu0 0.0
      %916 = vmatpush1.xpose.msra.mxu0 0.0
      %917 = vmatprep.subr.mxu0 0.0
      %918 = vmatpush1.xpose.msra.mxu0 0.0
      %919 = vmatprep.subr.mxu0 0.0
      %920 = vmatpush1.xpose.msra.mxu0 0.0
      %921 = vmatprep.subr.mxu0 0.0
      %922 = vmatpush1.xpose.msra.mxu0 0.0
      %923 = vmatprep.subr.mxu0 0.0
      %924 = vmatpush1.xpose.msra.mxu0 0.0
      %925 = vmatprep.subr.mxu0 0.0
      %926 = vmatpush1.xpose.msra.mxu0 0.0
      %927 = vmatprep.subr.mxu0 0.0
      %928 = vmatpush1.xpose.msra.mxu0 0.0
      %929 = vmatprep.subr.mxu0 0.0
      %930 = vmatpush1.xpose.msra.mxu0 0.0
      %931 = vmatprep.subr.mxu0 0.0
      %932 = vmatpush1.xpose.msra.mxu0 0.0
      %933 = vmatprep.subr.mxu0 0.0
      %934 = vmatpush1.xpose.msra.mxu0 0.0
      %935 = vmatprep.subr.mxu0 0.0
      %936 = vmatpush1.xpose.msra.mxu0 0.0
      %937 = vmatprep.subr.mxu0 0.0
      %938 = vmatpush1.xpose.msra.mxu0 0.0
      %939 = vmatprep.subr.mxu0 0.0
      %940 = vmatpush1.xpose.msra.mxu0 0.0
      %941 = vmatprep.subr.mxu0 0.0
      %942 = vmatpush1.xpose.msra.mxu0 0.0
      %943 = vmatprep.subr.mxu0 0.0
      %944 = vmatpush1.xpose.msra.mxu0 0.0
      %945 = vmatprep.subr.mxu0 0.0
      %946 = vmatpush1.xpose.msra.mxu0 0.0
      %947 = vmatprep.subr.mxu0 0.0
      %948 = vmatpush1.xpose.msra.mxu0 0.0
      %949 = vmatprep.subr.mxu0 0.0
      %950 = vmatpush1.xpose.msra.mxu0 0.0
      %951 = vmatprep.subr.mxu0 0.0
      %952 = vmatpush1.xpose.msra.mxu0 0.0
      %953 = vmatprep.subr.mxu0 0.0
      %954 = vmatpush1.xpose.msra.mxu0 0.0
      %955 = vmatprep.subr.mxu0 0.0
      %956 = vmatpush1.xpose.msra.mxu0 0.0
      %957 = vmatprep.subr.mxu0 0.0
      %958 = vmatpush1.xpose.msra.mxu0 0.0
      %959 = vmatprep.mubr.f32.mxu0 0.0
      %960 = vmatmul.mubr.f32.gmra.mrb[0].mxu0 %v891
      %v961 = vpop.f32.mrb[0].mxu0
      %v962 = vadd.f32 0.0, %v961
      %v963 = vpop.f32.mrb[0].mxu0
      %964 = vdwg.mxu0
      %s965 = scalar_lea.vmem [#allocation2], 24
      %v966 = vld [vmem:[%s965] sm:$0xff]
      %s967 = scalar_lea.vmem [#allocation3], 24
      %v968 = vld [vmem:[%s967] sm:$0xff]
      %v969 = vsel %vm384, %v962, -inf
      %970 = vmax.xlane.f32.xlu0 %v969
      %v971 = vpop.xlane.xlu0 %970
      %v972 = vmax.f32 %v966, %v971
      %v973 = vsub.f32 %v966, %v972
      %v974 = vmul.f32 %v973, 1.442695
      %v975 = vpow.pop %v974
      %977 = vset.pattern.permute.xlu0 0
      %978 = vperm.xlu0 %977, %v972
      %v979 = vpop.permute.xlu0 %978
      %v981 = vsub.f32 %v962, %v979
      %v982 = vmul.f32 %v981, 1.442695
      %v983 = vpow.pop %v982
      %v984 = vmul.f32 %v975, %v968
      %v985 = vsel %vm384, %v983, 0.0
      %986 = vadd.xlane.f32.xlu0 %v985
      %v987 = vpop.xlane.xlu0 %986
      %v988 = vadd.f32 %v984, %v987
      %989 = vst.msk [vmem:[%s967] sm:$0xff] %vm405, %v988
      %991 = vrot.lane.b32.xlu0 %v884, 32
      %v992 = vpop.permute.xlu0 %991
      %v995 = vsel %vm384, %v983, 0
      %997 = vmatprep.subr.mxu0 0.0
      %998 = vmatpush1.msra.mxu0 %v992
      %999 = vmatprep.subr.mxu0 0.0
      %1000 = vmatpush1.msra.mxu0 0.0
      %1001 = vmatprep.subr.mxu0 0.0
      %1002 = vmatpush1.msra.mxu0 0.0
      %1003 = vmatprep.subr.mxu0 0.0
      %1004 = vmatpush1.msra.mxu0 0.0
      %1005 = vmatprep.subr.mxu0 0.0
      %1006 = vmatpush1.msra.mxu0 0.0
      %1007 = vmatprep.subr.mxu0 0.0
      %1008 = vmatpush1.msra.mxu0 0.0
      %1009 = vmatprep.subr.mxu0 0.0
      %1010 = vmatpush1.msra.mxu0 0.0
      %1011 = vmatprep.subr.mxu0 0.0
      %1012 = vmatpush1.msra.mxu0 0.0
      %1013 = vmatprep.subr.mxu0 0.0
      %1014 = vmatpush1.msra.mxu0 0.0
      %1015 = vmatprep.subr.mxu0 0.0
      %1016 = vmatpush1.msra.mxu0 0.0
      %1017 = vmatprep.subr.mxu0 0.0
      %1018 = vmatpush1.msra.mxu0 0.0
      %1019 = vmatprep.subr.mxu0 0.0
      %1020 = vmatpush1.msra.mxu0 0.0
      %1021 = vmatprep.subr.mxu0 0.0
      %1022 = vmatpush1.msra.mxu0 0.0
      %1023 = vmatprep.subr.mxu0 0.0
      %1024 = vmatpush1.msra.mxu0 0.0
      %1025 = vmatprep.subr.mxu0 0.0
      %1026 = vmatpush1.msra.mxu0 0.0
      %1027 = vmatprep.subr.mxu0 0.0
      %1028 = vmatpush1.msra.mxu0 0.0
      %1029 = vmatprep.subr.mxu0 0.0
      %1030 = vmatpush1.msra.mxu0 0.0
      %1031 = vmatprep.subr.mxu0 0.0
      %1032 = vmatpush1.msra.mxu0 0.0
      %1033 = vmatprep.subr.mxu0 0.0
      %1034 = vmatpush1.msra.mxu0 0.0
      %1035 = vmatprep.subr.mxu0 0.0
      %1036 = vmatpush1.msra.mxu0 0.0
      %1037 = vmatprep.subr.mxu0 0.0
      %1038 = vmatpush1.msra.mxu0 0.0
      %1039 = vmatprep.subr.mxu0 0.0
      %1040 = vmatpush1.msra.mxu0 0.0
      %1041 = vmatprep.subr.mxu0 0.0
      %1042 = vmatpush1.msra.mxu0 0.0
      %1043 = vmatprep.subr.mxu0 0.0
      %1044 = vmatpush1.msra.mxu0 0.0
      %1045 = vmatprep.subr.mxu0 0.0
      %1046 = vmatpush1.msra.mxu0 0.0
      %1047 = vmatprep.subr.mxu0 0.0
      %1048 = vmatpush1.msra.mxu0 0.0
      %1049 = vmatprep.subr.mxu0 0.0
      %1050 = vmatpush1.msra.mxu0 0.0
      %1051 = vmatprep.subr.mxu0 0.0
      %1052 = vmatpush1.msra.mxu0 0.0
      %1053 = vmatprep.subr.mxu0 0.0
      %1054 = vmatpush1.msra.mxu0 0.0
      %1055 = vmatprep.subr.mxu0 0.0
      %1056 = vmatpush1.msra.mxu0 0.0
      %1057 = vmatprep.subr.mxu0 0.0
      %1058 = vmatpush1.msra.mxu0 0.0
      %1059 = vmatprep.subr.mxu0 0.0
      %1060 = vmatpush1.msra.mxu0 0.0
      %1061 = vmatprep.mubr.f32.mxu0 0.0
      %1062 = vmatmul.mubr.f32.gmra.mrb[0].mxu0 %v995
      %v1063 = vpop.f32.mrb[0].mxu0
      %v1064 = vadd.f32 0.0, %v1063
      %v1065 = vpop.f32.mrb[0].mxu0
      %1066 = vdwg.mxu0
      %s1067 = scalar_lea.vmem [#allocation4], 24
      %v1068 = vld [vmem:[%s1067] sm:$0xff]
      %1070 = vset.pattern.permute.xlu0 0
      %1071 = vperm.xlu0 %1070, %v975
      %v1072 = vpop.permute.xlu0 %1071
      %v1074 = vmul.f32 %v1072, %v1068
      %v1075 = vadd.f32 %v1074, %v1064
      %1076 = vst.msk [vmem:[%s1067] sm:$0xff] %vm305, %v1075
      %1077 = vst.msk [vmem:[%s965] sm:$0xff] %vm405, %v972
      // Predicated region
      $region37: #{attention_forward.4} parent=31 // pred_check
        %p1078 = pneg %p284
      $region38: #{attention_forward.4} parent=31 // pred_check_branch
        %1080 = sbr.rel (%p1078) target = $region40
      $region39: #{attention_forward.4} parent=31 // pred_region
        %v1081 = vld [vmem:[#allocation3] sm:$0xff]
        %v1082 = vrcp.pop %v1081
        %v1083 = vld [vmem:[#allocation4] sm:$0xff]
        %1085 = vset.pattern.permute.xlu0 0
        %1086 = vperm.xlu0 %1085, %v1082
        %v1087 = vpop.permute.xlu0 %1086
        %v1089 = vmul.f32 %v1083, %v1087
        %v1090 = vld [vmem:[%s575] sm:$0xff]
        %v1091 = vrcp.pop %v1090
        %v1092 = vld [vmem:[%s675] sm:$0xff]
        %1094 = vset.pattern.permute.xlu0 0
        %1095 = vperm.xlu0 %1094, %v1091
        %v1096 = vpop.permute.xlu0 %1095
        %v1098 = vmul.f32 %v1092, %v1096
        %v1099 = vld [vmem:[%s771] sm:$0xff]
        %v1100 = vrcp.pop %v1099
        %v1101 = vld [vmem:[%s871] sm:$0xff]
        %1103 = vset.pattern.permute.xlu0 0
        %1104 = vperm.xlu0 %1103, %v1100
        %v1105 = vpop.permute.xlu0 %1104
        %v1107 = vmul.f32 %v1101, %v1105
        %v1108 = vld [vmem:[%s967] sm:$0xff]
        %v1109 = vrcp.pop %v1108
        %v1110 = vld [vmem:[%s1067] sm:$0xff]
        %1112 = vset.pattern.permute.xlu0 0
        %1113 = vperm.xlu0 %1112, %v1109
        %v1114 = vpop.permute.xlu0 %1113
        %v1116 = vmul.f32 %v1110, %v1114
        %1118 = vrot.lane.b32.xlu0 %v1098, 32
        %v1119 = vpop.permute.xlu0 %1118
        %1122 = vrot.lane.b32.xlu0 %v1107, 64
        %v1123 = vpop.permute.xlu0 %1122
        %1126 = vrot.lane.b32.xlu0 %v1116, 96
        %v1127 = vpop.permute.xlu0 %1126
        %v1129 = vsel %vm305, %v1089, %v1119
        %vm1130 = vcmask 523264
        %v1131 = vsel %vm1130, %v1129, %v1123
        %vm1132 = vcmask 785408
        %v1133 = vsel %vm1132, %v1131, %v1127
        %1134 = vst [vmem:[%s283] sm:$0xff] %v1133
      $region40: #{attention_forward.4} parent=31 // pred_fallthru
        _
      %p1135 = scmp.lt.s32.totalorder %s19, 1
      %s1136 = scalar_select %p1135, %s19, 1
      %p1137 = scmp.lt.s32.totalorder %s20, 0
      %s1138 = scalar_select %p1137, %s20, 0
      %s1139 = sadd.s32 %s1138, %s1136
      %s1140 = smul.addr %s1139, 8
      %s1141 = scalar_lea.vmem %s3, %s1140
      // Predicated region
      $region41: #{attention_forward.4} parent=31 // pred_check
        %p1142 = pneg %p137
      $region42: #{attention_forward.4} parent=31 // pred_check_branch
        %1144 = sbr.rel (%p1142) target = $region44
      $region43: #{attention_forward.4} parent=31 // pred_region
        _
      $region44: #{attention_forward.4} parent=31 // pred_fallthru
        _
    $region32: #{attention_forward.4} parent=5 // pred_fallthru
      _
    %p1145 = scmp.le.s32.totalorder 2, %s9
    // Predicated region
    $region45: #{attention_forward.4} parent=5 // pred_check
      %p1146 = pneg %p1145
    $region46: #{attention_forward.4} parent=5 // pred_check_branch
      %1148 = sbr.rel (%p1146) target = $region48
    $region47: #{attention_forward.4} parent=5 // pred_region
      %s1149 = ssub.s32 %s9, 2
      // Predicated region
      $region49: #{attention_forward.4} parent=47 // pred_check
        %p1150 = pneg %p143
      $region50: #{attention_forward.4} parent=47 // pred_check_branch
        %1152 = sbr.rel (%p1150) target = $region52
      $region51: #{attention_forward.4} parent=47 // pred_region
        %p1153 = scmp.lt.s32.totalorder %s22, 1
        %s1154 = scalar_select %p1153, %s22, 1
        %p1155 = scmp.lt.s32.totalorder %s23, 0
        %s1156 = scalar_select %p1155, %s23, 0
        %s1157 = sadd.s32 %s1156, %s1154
        %s1158 = smul.addr %s1157, 8
        %s1159 = scalar_lea.vmem %s3, %s1158
      $region52: #{attention_forward.4} parent=47 // pred_fallthru
        _
    $region48: #{attention_forward.4} parent=5 // pred_fallthru
      _
  $region6: #{attention_forward.4} parent=0 // loop_footer
    %s13 = sadd.s32 1, %s9
  $region7: #{attention_forward.4} parent=0 // loop_footer_branch
    %8 = sbr.rel target = $region3
  $region8: #{attention_forward.4} parent=0 // loop_exit
    _

</llo_original>
